<compile_context>
chip_gen: v7x
topology: tpu7x:2x2x1
jax: 0.10.0
libtpu: 0.0.40
codegen_flags: <defaults>
</compile_context>

<pallas_src>
import functools

import jax
import jax.numpy as jnp
from jax import lax
from jax.experimental import pallas as pl
from jax.experimental.pallas import tpu as pltpu


def _round_up(x, m):
    return ((x + m - 1) // m) * m


def _cdiv(a, b):
    return (a + b - 1) // b


def _hw_vmem_bytes():
    try:
        info = pltpu.get_tpu_info()
        cap = getattr(info, "vmem_capacity_bytes", None)
        if cap:
            return int(cap)
    except Exception:
        pass
    return 64 << 20  # conservative: v7x per-TensorCore VMEM


def _vmem_limit(bytes_estimate):
    """Explicit scoped-VMEM limit, capped below physical VMEM (v7x = 64 MiB)."""
    cap = max(32 << 20, _hw_vmem_bytes() - (8 << 20))
    return int(min(max(bytes_estimate + (4 << 20), 32 << 20), cap))


def _const_spec(shape):
    """Block identical on every grid step (weights / bias rows): constant
    index_map keeps it resident; single pipeline buffer reclaims VMEM."""
    index_map = lambda *_: (0,) * len(shape)
    try:
        return pl.BlockSpec(shape, index_map,
                            pipeline_mode=pl.Buffered(buffer_count=1))
    except Exception:
        return pl.BlockSpec(shape, index_map)


def _pick_heads_per_block(num_heads, head_dim):
    """Smallest divisor of H whose lane width is >=256 (else >=128) and a
    multiple of 128; fall back to all heads (block == full E, always legal)."""
    for target in (256, 128):
        for hb in range(1, num_heads + 1):
            if num_heads % hb:
                continue
            w = hb * head_dim
            if w >= target and w % 128 == 0:
                return hb
    return num_heads


# ---------------------------------------------------------------------------
# Kernel 1: LayerNorm1 + fused qkv projection (scale pre-folded into Wq/bq)
# ---------------------------------------------------------------------------
def _ln_qkv_kernel(x_ref, g_ref, b_ref, wqkv_ref, bqkv_ref,
                   q_ref, k_ref, v_ref, *, eps, embed_dim):
    x = x_ref[...].astype(jnp.float32)
    mean = jnp.mean(x, axis=-1, keepdims=True)
    var = jnp.mean(jnp.square(x - mean), axis=-1, keepdims=True)
    h = (x - mean) * lax.rsqrt(var + eps)
    h = (h * g_ref[...] + b_ref[...]).astype(wqkv_ref.dtype)   # gamma/beta f32 rows
    qkv = jnp.dot(h, wqkv_ref[...],
                  preferred_element_type=jnp.float32) + bqkv_ref[...]
    qkv = qkv.astype(q_ref.dtype)
    E = embed_dim
    q_ref[...] = qkv[:, :E]          # q already scaled (folded into Wq/bq)
    k_ref[...] = qkv[:, E:2 * E]
    v_ref[...] = qkv[:, 2 * E:]


# ---------------------------------------------------------------------------
# Kernel 2: per-(batch, head-group) masked softmax attention
# ---------------------------------------------------------------------------
def _attn_kernel(*refs, heads_per_block, head_dim, with_mask):
    if with_mask:
        q_ref, k_ref, v_ref, mask_ref, o_ref = refs
        mask = mask_ref[0, 0]                            # (S, S) f32, loaded once
    else:
        q_ref, k_ref, v_ref, o_ref = refs
        mask = None
    outs = []
    for h in range(heads_per_block):                     # static, unrolled
        c0, c1 = h * head_dim, (h + 1) * head_dim
        q = q_ref[0, :, c0:c1]                           # (S, Dh) compute dtype
        k = k_ref[0, :, c0:c1]
        v = v_ref[0, :, c0:c1]
        s = lax.dot_general(q, k, (((1,), (1,)), ((), ())),
                            preferred_element_type=jnp.float32)   # (S, S) f32
        if with_mask:
            s = s + mask
        s = s - jnp.max(s, axis=-1, keepdims=True)
        p = jnp.exp(s)
        l = jnp.sum(p, axis=-1, keepdims=True)
        o = jnp.dot(p.astype(v.dtype), v,
                    preferred_element_type=jnp.float32)  # (S, Dh) unnormalized
        outs.append(o * pl.reciprocal(l, approx=True))   # normalize after PV
    o_blk = outs[0] if len(outs) == 1 else jnp.concatenate(outs, axis=-1)
    o_ref[...] = o_blk[None].astype(o_ref.dtype)         # lane-dense single store


# ---------------------------------------------------------------------------
# Kernel 3: out_proj + residual + LayerNorm2 + fc1 + quick_gelu + fc2 + residual
# ---------------------------------------------------------------------------
def _out_mlp_kernel(a_ref, res_ref, wo_ref, bo_ref, g_ref, b_ref,
                    w1_ref, b1_ref, w2_ref, b2_ref, o_ref, *, eps):
    a = jnp.dot(a_ref[...], wo_ref[...],
                preferred_element_type=jnp.float32) + bo_ref[...]
    x = a + res_ref[...].astype(jnp.float32)             # residual 1, kept in f32
    mean = jnp.mean(x, axis=-1, keepdims=True)
    var = jnp.mean(jnp.square(x - mean), axis=-1, keepdims=True)
    h = (x - mean) * lax.rsqrt(var + eps)
    h = (h * g_ref[...] + b_ref[...]).astype(w1_ref.dtype)
    t = jnp.dot(h, w1_ref[...],
                preferred_element_type=jnp.float32) + b1_ref[...]
    t = t * jax.nn.sigmoid(1.702 * t)                    # quick_gelu in f32 (EUP)
    out = jnp.dot(t.astype(w2_ref.dtype), w2_ref[...],
                  preferred_element_type=jnp.float32) + b2_ref[...]
    o_ref[...] = (out + x).astype(o_ref.dtype)           # residual 2


# ---------------------------------------------------------------------------
# Wrapper: full CLIPEncoderLayer forward
# ---------------------------------------------------------------------------
@functools.partial(jax.jit,
                   static_argnames=("num_heads", "eps", "compute_dtype", "tm"))
def clip_encoder_layer(hidden_states, params, attention_mask=None,
                       causal_attention_mask=None, *, num_heads,
                       eps=1e-5, compute_dtype=jnp.bfloat16, tm=512):
    """CLIPEncoderLayer forward (inference).

    hidden_states: (batch, seq, hidden).
    params: dict with weights pre-transposed to (in_features, out_features):
      ln1_g, ln1_b, wq, bq, wk, bk, wv, bv, wo, bo, ln2_g, ln2_b, w1, b1, w2, b2.
    attention_mask / causal_attention_mask: optional additive (B, 1, S, S) masks.
    tm: row tile (512 default; lower to 256 if VMEM-tight on v7x).
    """
    B, S, E = hidden_states.shape
    H = num_heads
    Dh = E // H
    if H * Dh != E:
        raise ValueError("hidden size must be divisible by num_heads")
    scale = float(Dh) ** -0.5
    out_dtype = hidden_states.dtype
    csize = jnp.dtype(compute_dtype).itemsize

    # ---- sequence padding (sublane alignment; padded keys masked below) ----
    S_pad = _round_up(S, 8)
    x3 = hidden_states
    if S_pad != S:
        x3 = jnp.pad(x3, ((0, 0), (0, S_pad - S), (0, 0)))
    M = B * S_pad
    x2d = x3.reshape(M, E).astype(compute_dtype)

    # ---- row tiling (ragged last block handled by Pallas masking) ----
    tm_eff = max(8, min(_round_up(tm, 8), M))
    grid_m = _cdiv(M, tm_eff)
    if grid_m < 2 and M > 8:          # >=2 steps so both v7x TensorCores get work
        tm_eff = _round_up(_cdiv(M, 2), 8)
        grid_m = _cdiv(M, tm_eff)
    row_spec = pl.BlockSpec((tm_eff, E), lambda i: (i, 0))

    # ---- weight prep: fused qkv weight, scale folded into q, f32 bias rows ----
    def f32row(v):
        return v.reshape(1, -1).astype(jnp.float32)

    wqkv = jnp.concatenate(
        [params["wq"].astype(jnp.float32) * scale,
         params["wk"].astype(jnp.float32),
         params["wv"].astype(jnp.float32)], axis=1).astype(compute_dtype)
    bqkv = jnp.concatenate(
        [params["bq"].astype(jnp.float32) * scale,
         params["bk"].astype(jnp.float32),
         params["bv"].astype(jnp.float32)]).reshape(1, -1)
    g1, be1 = f32row(params["ln1_g"]), f32row(params["ln1_b"])
    g2, be2 = f32row(params["ln2_g"]), f32row(params["ln2_b"])
    bo, b1, b2 = f32row(params["bo"]), f32row(params["b1"]), f32row(params["b2"])
    wo = params["wo"].astype(compute_dtype)
    w1 = params["w1"].astype(compute_dtype)
    w2 = params["w2"].astype(compute_dtype)
    inter = w1.shape[1]

    # ------------------------------------------------------- LN1 + fused qkv
    est1 = (2 * 4 * tm_eff * E * csize
            + 2 * (3 * E * E * csize + 8 * E * 4)
            + 5 * tm_eff * E * 4)
    q2d, k2d, v2d = pl.pallas_call(
        functools.partial(_ln_qkv_kernel, eps=eps, embed_dim=E),
        out_shape=(jax.ShapeDtypeStruct((M, E), compute_dtype),) * 3,
        grid_spec=pltpu.PrefetchScalarGridSpec(
            num_scalar_prefetch=0,
            grid=(grid_m,),
            in_specs=[row_spec,
                      _const_spec((1, E)), _const_spec((1, E)),
                      _const_spec((E, 3 * E)), _const_spec((1, 3 * E))],
            out_specs=[row_spec, row_spec, row_spec],
        ),
        compiler_params=pltpu.CompilerParams(
            dimension_semantics=("parallel",),
            vmem_limit_bytes=_vmem_limit(est1)),
    )(x2d, g1, be1, wqkv, bqkv)

    # ------------------------------------------------------- attention core
    # TODO(synk): attention dropout (training) and output_attentions return are
    # omitted -- this is the inference forward.
    need_pad_mask = S_pad != S
    has_mask = (attention_mask is not None or causal_attention_mask is not None
                or need_pad_mask)
    if has_mask:
        mask = jnp.zeros((B, 1, S, S), jnp.float32)
        if causal_attention_mask is not None:
            mask = mask + causal_attention_mask.astype(jnp.float32)
        if attention_mask is not None:
            mask = mask + attention_mask.astype(jnp.float32)
        if need_pad_mask:
            mask = jnp.pad(mask, ((0, 0), (0, 0),
                                  (0, S_pad - S), (0, S_pad - S)))
            mask = mask.at[:, :, :, S:].set(-1e9)    # padded keys contribute ~0

    hb = _pick_heads_per_block(H, Dh)
    Wb = hb * Dh
    n_grp = H // hb

    q3d = q2d.reshape(B, S_pad, E)                   # free reshapes, no transposes
    k3d = k2d.reshape(B, S_pad, E)
    v3d = v2d.reshape(B, S_pad, E)

    head_spec = pl.BlockSpec((1, S_pad, Wb), lambda b, g: (b, 0, g))
    in_specs = [head_spec, head_spec, head_spec]
    inputs = [q3d, k3d, v3d]
    if has_mask:
        # constant over the head-group axis -> fetched once per batch element
        in_specs.append(pl.BlockSpec((1, 1, S_pad, S_pad),
                                     lambda b, g: (b, 0, 0, 0)))
        inputs.append(mask)

    est_attn = (2 * 4 * S_pad * Wb * csize
                + (2 * S_pad * S_pad * 4 if has_mask else 0)
                + 3 * S_pad * S_pad * 4
                + (hb + 1) * S_pad * Dh * 4 + S_pad * Wb * 4)
    attn3d = pl.pallas_call(
        functools.partial(_attn_kernel, heads_per_block=hb, head_dim=Dh,
                          with_mask=has_mask),
        out_shape=jax.ShapeDtypeStruct((B, S_pad, E), compute_dtype),
        grid_spec=pltpu.PrefetchScalarGridSpec(
            num_scalar_prefetch=0,
            grid=(B, n_grp),
            in_specs=in_specs,
            out_specs=pl.BlockSpec((1, S_pad, Wb), lambda b, g: (b, 0, g)),
        ),
        compiler_params=pltpu.CompilerParams(
            dimension_semantics=("parallel", "parallel"),
            vmem_limit_bytes=_vmem_limit(est_attn)),
    )(*inputs)

    # ----------------------- out_proj + residual + LN2 + MLP + residual (fused)
    attn2d = attn3d.reshape(M, E)                    # free reshape
    est2 = (2 * 2 * tm_eff * E * csize
            + 2 * tm_eff * E * jnp.dtype(out_dtype).itemsize
            + 2 * ((E * E + 2 * E * inter) * csize + (4 * E + inter) * 4)
            + (3 * tm_eff * E + 2 * tm_eff * inter) * 4)
    out2d = pl.pallas_call(
        functools.partial(_out_mlp_kernel, eps=eps),
        out_shape=jax.ShapeDtypeStruct((M, E), out_dtype),
        grid_spec=pltpu.PrefetchScalarGridSpec(
            num_scalar_prefetch=0,
            grid=(grid_m,),
            in_specs=[row_spec, row_spec,
                      _const_spec((E, E)), _const_spec((1, E)),
                      _const_spec((1, E)), _const_spec((1, E)),
                      _const_spec((E, inter)), _const_spec((1, inter)),
                      _const_spec((inter, E)), _const_spec((1, E))],
            out_specs=row_spec,
        ),
        compiler_params=pltpu.CompilerParams(
            dimension_semantics=("parallel",),
            vmem_limit_bytes=_vmem_limit(est2)),
    )(attn2d, x2d, wo, bo, g2, be2, w1, b1, w2, b2)

    out = out2d.reshape(B, S_pad, E)
    if S_pad != S:
        out = out[:, :S]
    return out


# ---------------------------------------------------------------------------
# Pure-JAX reference (mirrors the PyTorch module in f32)
# ---------------------------------------------------------------------------
def reference_encoder_layer(x, p, attention_mask, causal_attention_mask,
                            num_heads, eps):
    B, S, E = x.shape
    H = num_heads
    Dh = E // H
    scale = float(Dh) ** -0.5

    def ln(v, g, b):
        m = jnp.mean(v, axis=-1, keepdims=True)
        var = jnp.mean(jnp.square(v - m), axis=-1, keepdims=True)
        return (v - m) / jnp.sqrt(var + eps) * g + b

    residual = x
    h = ln(x, p["ln1_g"], p["ln1_b"])
    q = (h @ p["wq"] + p["bq"]) * scale
    k = h @ p["wk"] + p["bk"]
    v = h @ p["wv"] + p["bv"]

    def split(t):
        return t.reshape(B, S, H, Dh).transpose(0, 2, 1, 3)

    q, k, v = split(q), split(k), split(v)
    s = jnp.einsum("bhqd,bhkd->bhqk", q, k)
    if causal_attention_mask is not None:
        s = s + causal_attention_mask
    if attention_mask is not None:
        s = s + attention_mask
    probs = jax.nn.softmax(s, axis=-1)
    o = jnp.einsum("bhqk,bhkd->bhqd", probs, v)
    o = o.transpose(0, 2, 1, 3).reshape(B, S, E)
    o = o @ p["wo"] + p["bo"]
    x = residual + o

    residual = x
    h = ln(x, p["ln2_g"], p["ln2_b"])
    h = h @ p["w1"] + p["b1"]
    h = h * jax.nn.sigmoid(1.702 * h)
    h = h @ p["w2"] + p["b2"]
    return residual + h


if __name__ == "__main__":
    def make_params(key, E, INTER):
        ks = jax.random.split(key, 16)

        def linear(kw, kb, fan_in, fan_out):
            bound = 1.0 / (fan_in ** 0.5)
            w = jax.random.uniform(kw, (fan_in, fan_out), jnp.float32,
                                   -bound, bound)
            b = jax.random.uniform(kb, (fan_out,), jnp.float32, -bound, bound)
            return w, b

        wq, bq = linear(ks[0], ks[1], E, E)
        wk, bk = linear(ks[2], ks[3], E, E)
        wv, bv = linear(ks[4], ks[5], E, E)
        wo, bo = linear(ks[6], ks[7], E, E)
        w1, b1 = linear(ks[8], ks[9], E, INTER)
        w2, b2 = linear(ks[10], ks[11], INTER, E)
        return dict(
            ln1_g=1.0 + 0.1 * jax.random.normal(ks[12], (E,), jnp.float32),
            ln1_b=0.1 * jax.random.normal(ks[13], (E,), jnp.float32),
            ln2_g=1.0 + 0.1 * jax.random.normal(ks[14], (E,), jnp.float32),
            ln2_b=0.1 * jax.random.normal(ks[15], (E,), jnp.float32),
            wq=wq, bq=bq, wk=wk, bk=bk, wv=wv, bv=bv, wo=wo, bo=bo,
            w1=w1, b1=b1, w2=w2, b2=b2)

    key = jax.random.PRNGKey(0)
    k1, k2, k3, k4 = jax.random.split(key, 4)
    EPS = 1e-5

    # ---- config 1: tiny (B=2, S=8, E=32, H=4), causal + padding masks ----
    B, S, E, H, INTER = 2, 8, 32, 4, 128
    params = make_params(k1, E, INTER)
    x = jax.random.normal(k2, (B, S, E), jnp.float32)
    attn_mask = jnp.zeros((B, 1, S, S), jnp.float32)
    attn_mask = attn_mask.at[1, :, :, S - 2:].set(-1e9)      # pad 2 keys, sample 1
    causal = jnp.triu(jnp.full((S, S), -1e9, jnp.float32), k=1)
    causal_mask = jnp.broadcast_to(causal, (B, 1, S, S))

    ref = reference_encoder_layer(x, params, attn_mask, causal_mask, H, EPS)
    out = jax.block_until_ready(
        clip_encoder_layer(x, params, attn_mask, causal_mask,
                           num_heads=H, eps=EPS, compute_dtype=jnp.float32))
    assert out.shape == (B, S, E)
    assert bool(jnp.all(jnp.isfinite(out)))
    rel = jnp.linalg.norm(out - ref) / jnp.linalg.norm(ref)
    assert rel < 2e-2, f"f32 masked path relative error too large: {rel}"

    # no-mask variant (CLIP vision-tower case) -> exercises the mask-free kernel.
    ref_nm = reference_encoder_layer(x, params, None, None, H, EPS)
    out_nm = jax.block_until_ready(
        clip_encoder_layer(x, params, num_heads=H, eps=EPS,
                           compute_dtype=jnp.float32))
    rel_nm = jnp.linalg.norm(out_nm - ref_nm) / jnp.linalg.norm(ref_nm)
    assert rel_nm < 2e-2, f"no-mask path relative error too large: {rel_nm}"

    # bf16 fast path (the perf configuration).
    out_fast = jax.block_until_ready(
        clip_encoder_layer(x, params, attn_mask, causal_mask,
                           num_heads=H, eps=EPS))
    rel_fast = (jnp.linalg.norm(out_fast.astype(jnp.float32) - ref)
                / jnp.linalg.norm(ref))
    assert rel_fast < 5e-2, f"bf16 path relative error too large: {rel_fast}"

    # ---- config 2: ragged seq (S=13 -> padded 16), multi-tile grid, hb < H ----
    B2, S2, E2, H2, INTER2 = 2, 13, 512, 8, 1024
    params2 = make_params(k3, E2, INTER2)
    x2 = jax.random.normal(k4, (B2, S2, E2), jnp.float32)
    ref2 = reference_encoder_layer(x2, params2, None, None, H2, EPS)
    out2 = jax.block_until_ready(
        clip_encoder_layer(x2, params2, num_heads=H2, eps=EPS,
                           compute_dtype=jnp.float32))
    assert out2.shape == (B2, S2, E2)
    assert bool(jnp.all(jnp.isfinite(out2)))
    rel2 = jnp.linalg.norm(out2 - ref2) / jnp.linalg.norm(ref2)
    assert rel2 < 2e-2, f"padded-seq path relative error too large: {rel2}"

    print("KERNEL_OK")
</pallas_src>

<mosaic_0001>
module attributes {stable_mosaic.version = 11 : i64} {
  func.func @_ln_qkv_kernel(%arg0: i32, %arg1: memref<8x32xf32, #tpu.memory_space<vmem>>, %arg2: memref<1x32xf32, #tpu.memory_space<vmem>>, %arg3: memref<1x32xf32, #tpu.memory_space<vmem>>, %arg4: memref<32x96xf32, #tpu.memory_space<vmem>>, %arg5: memref<1x96xf32, #tpu.memory_space<vmem>>, %arg6: memref<8x32xf32, #tpu.memory_space<vmem>>, %arg7: memref<8x32xf32, #tpu.memory_space<vmem>>, %arg8: memref<8x32xf32, #tpu.memory_space<vmem>>) attributes {dimension_semantics = [#tpu.dimension_semantics<parallel>], iteration_bounds = array<i64: 2>, scalar_prefetch = 0 : i64, scratch_operands = 0 : i64, tpu.core_type = #tpu.core_type<tc>, window_params = [{transform_indices = @transform_0, window_bounds = array<i64: 8, 32>}, {pipeline_mode = #tpu.pipeline_mode<synchronous>, transform_indices = @transform_1, window_bounds = array<i64: 1, 32>}, {pipeline_mode = #tpu.pipeline_mode<synchronous>, transform_indices = @transform_2, window_bounds = array<i64: 1, 32>}, {pipeline_mode = #tpu.pipeline_mode<synchronous>, transform_indices = @transform_3, window_bounds = array<i64: 32, 96>}, {pipeline_mode = #tpu.pipeline_mode<synchronous>, transform_indices = @transform_4, window_bounds = array<i64: 1, 96>}, {transform_indices = @transform_5, window_bounds = array<i64: 8, 32>}, {transform_indices = @transform_6, window_bounds = array<i64: 8, 32>}, {transform_indices = @transform_7, window_bounds = array<i64: 8, 32>}]} {
    %c0 = arith.constant 0 : index
    %c0_0 = arith.constant 0 : index
    %0 = vector.load %arg1[%c0, %c0_0] : memref<8x32xf32, #tpu.memory_space<vmem>>, vector<8x32xf32>
    %cst = arith.constant dense<0.000000e+00> : vector<8xf32>
    %1 = vector.multi_reduction <add>, %0, %cst [1] : vector<8x32xf32> to vector<8xf32>
    %2 = vector.shape_cast %1 : vector<8xf32> to vector<8x1xf32>
    %cst_1 = arith.constant 3.200000e+01 : f32
    %3 = vector.broadcast %cst_1 : f32 to vector<8x1xf32>
    %4 = arith.divf %2, %3 : vector<8x1xf32>
    %5 = vector.broadcast %4 : vector<8x1xf32> to vector<8x32xf32>
    %6 = arith.subf %0, %5 : vector<8x32xf32>
    %7 = arith.mulf %6, %6 : vector<8x32xf32>
    %cst_2 = arith.constant dense<0.000000e+00> : vector<8xf32>
    %8 = vector.multi_reduction <add>, %7, %cst_2 [1] : vector<8x32xf32> to vector<8xf32>
    %9 = vector.shape_cast %8 : vector<8xf32> to vector<8x1xf32>
    %cst_3 = arith.constant 3.200000e+01 : f32
    %10 = vector.broadcast %cst_3 : f32 to vector<8x1xf32>
    %11 = arith.divf %9, %10 : vector<8x1xf32>
    %12 = vector.broadcast %4 : vector<8x1xf32> to vector<8x32xf32>
    %13 = arith.subf %0, %12 : vector<8x32xf32>
    %cst_4 = arith.constant 9.99999974E-6 : f32
    %14 = vector.broadcast %cst_4 : f32 to vector<8x1xf32>
    %15 = arith.addf %11, %14 : vector<8x1xf32>
    %16 = math.rsqrt %15 : vector<8x1xf32>
    %17 = vector.broadcast %16 : vector<8x1xf32> to vector<8x32xf32>
    %18 = arith.mulf %13, %17 : vector<8x32xf32>
    %c0_5 = arith.constant 0 : index
    %c0_6 = arith.constant 0 : index
    %19 = vector.load %arg2[%c0_5, %c0_6] : memref<1x32xf32, #tpu.memory_space<vmem>>, vector<1x32xf32>
    %20 = vector.broadcast %19 : vector<1x32xf32> to vector<8x32xf32>
    %21 = arith.mulf %18, %20 : vector<8x32xf32>
    %c0_7 = arith.constant 0 : index
    %c0_8 = arith.constant 0 : index
    %22 = vector.load %arg3[%c0_7, %c0_8] : memref<1x32xf32, #tpu.memory_space<vmem>>, vector<1x32xf32>
    %23 = vector.broadcast %22 : vector<1x32xf32> to vector<8x32xf32>
    %24 = arith.addf %21, %23 : vector<8x32xf32>
    %c0_9 = arith.constant 0 : index
    %c0_10 = arith.constant 0 : index
    %25 = vector.load %arg4[%c0_9, %c0_10] : memref<32x96xf32, #tpu.memory_space<vmem>>, vector<32x96xf32>
    %cst_11 = arith.constant dense<0.000000e+00> : vector<8x96xf32>
    %26 = tpu.matmul %24, %25, %cst_11 {dimension_numbers = #tpu.dot_dimension_numbers<[1], [0], [0], [1], [0, 0, 1, 1], [], []>} : vector<8x32xf32>, vector<32x96xf32>, vector<8x96xf32> -> vector<8x96xf32>
    %c0_12 = arith.constant 0 : index
    %c0_13 = arith.constant 0 : index
    %27 = vector.load %arg5[%c0_12, %c0_13] : memref<1x96xf32, #tpu.memory_space<vmem>>, vector<1x96xf32>
    %28 = vector.broadcast %27 : vector<1x96xf32> to vector<8x96xf32>
    %29 = arith.addf %26, %28 : vector<8x96xf32>
    %30 = vector.extract_strided_slice %29 {offsets = [0, 0], sizes = [8, 32], strides = [1, 1]} : vector<8x96xf32> to vector<8x32xf32>
    %c0_14 = arith.constant 0 : index
    %c0_15 = arith.constant 0 : index
    %31 = vector.load %arg6[%c0_14, %c0_15] : memref<8x32xf32, #tpu.memory_space<vmem>>, vector<8x32xf32>
    tpu.vector_store %arg6[%c0_14, %c0_15], %30 {strides = array<i32>} : memref<8x32xf32, #tpu.memory_space<vmem>>, vector<8x32xf32>,
    %32 = vector.extract_strided_slice %29 {offsets = [0, 32], sizes = [8, 32], strides = [1, 1]} : vector<8x96xf32> to vector<8x32xf32>
    %c0_16 = arith.constant 0 : index
    %c0_17 = arith.constant 0 : index
    %33 = vector.load %arg7[%c0_16, %c0_17] : memref<8x32xf32, #tpu.memory_space<vmem>>, vector<8x32xf32>
    tpu.vector_store %arg7[%c0_16, %c0_17], %32 {strides = array<i32>} : memref<8x32xf32, #tpu.memory_space<vmem>>, vector<8x32xf32>,
    %34 = vector.extract_strided_slice %29 {offsets = [0, 64], sizes = [8, 32], strides = [1, 1]} : vector<8x96xf32> to vector<8x32xf32>
    %c0_18 = arith.constant 0 : index
    %c0_19 = arith.constant 0 : index
    %35 = vector.load %arg8[%c0_18, %c0_19] : memref<8x32xf32, #tpu.memory_space<vmem>>, vector<8x32xf32>
    tpu.vector_store %arg8[%c0_18, %c0_19], %34 {strides = array<i32>} : memref<8x32xf32, #tpu.memory_space<vmem>>, vector<8x32xf32>,
    return
  }
  func.func @transform_0(%arg0: i32) -> (i32, i32) {
    %c0_i32 = arith.constant 0 : i32
    %c0_i32_0 = arith.constant 0 : i32
    return %arg0, %c0_i32 : i32, i32
  }
  func.func @transform_1(%arg0: i32) -> (i32, i32) {
    %c0_i32 = arith.constant 0 : i32
    %c0_i32_0 = arith.constant 0 : i32
    %c0_i32_1 = arith.constant 0 : i32
    return %c0_i32, %c0_i32_0 : i32, i32
  }
  func.func @transform_2(%arg0: i32) -> (i32, i32) {
    %c0_i32 = arith.constant 0 : i32
    %c0_i32_0 = arith.constant 0 : i32
    %c0_i32_1 = arith.constant 0 : i32
    return %c0_i32, %c0_i32_0 : i32, i32
  }
  func.func @transform_3(%arg0: i32) -> (i32, i32) {
    %c0_i32 = arith.constant 0 : i32
    %c0_i32_0 = arith.constant 0 : i32
    %c0_i32_1 = arith.constant 0 : i32
    return %c0_i32, %c0_i32_0 : i32, i32
  }
  func.func @transform_4(%arg0: i32) -> (i32, i32) {
    %c0_i32 = arith.constant 0 : i32
    %c0_i32_0 = arith.constant 0 : i32
    %c0_i32_1 = arith.constant 0 : i32
    return %c0_i32, %c0_i32_0 : i32, i32
  }
  func.func @transform_5(%arg0: i32) -> (i32, i32) {
    %c0_i32 = arith.constant 0 : i32
    %c0_i32_0 = arith.constant 0 : i32
    return %arg0, %c0_i32 : i32, i32
  }
  func.func @transform_6(%arg0: i32) -> (i32, i32) {
    %c0_i32 = arith.constant 0 : i32
    %c0_i32_0 = arith.constant 0 : i32
    return %arg0, %c0_i32 : i32, i32
  }
  func.func @transform_7(%arg0: i32) -> (i32, i32) {
    %c0_i32 = arith.constant 0 : i32
    %c0_i32_0 = arith.constant 0 : i32
    return %arg0, %c0_i32 : i32, i32
  }
}

module attributes {stable_mosaic.version = 11 : i64} {
  func.func @_out_mlp_kernel(%arg0: i32, %arg1: memref<8x32xf32, #tpu.memory_space<vmem>>, %arg2: memref<8x32xf32, #tpu.memory_space<vmem>>, %arg3: memref<32x32xf32, #tpu.memory_space<vmem>>, %arg4: memref<1x32xf32, #tpu.memory_space<vmem>>, %arg5: memref<1x32xf32, #tpu.memory_space<vmem>>, %arg6: memref<1x32xf32, #tpu.memory_space<vmem>>, %arg7: memref<32x128xf32, #tpu.memory_space<vmem>>, %arg8: memref<1x128xf32, #tpu.memory_space<vmem>>, %arg9: memref<128x32xf32, #tpu.memory_space<vmem>>, %arg10: memref<1x32xf32, #tpu.memory_space<vmem>>, %arg11: memref<8x32xf32, #tpu.memory_space<vmem>>) attributes {dimension_semantics = [#tpu.dimension_semantics<parallel>], iteration_bounds = array<i64: 2>, scalar_prefetch = 0 : i64, scratch_operands = 0 : i64, tpu.core_type = #tpu.core_type<tc>, window_params = [{transform_indices = @transform_0, window_bounds = array<i64: 8, 32>}, {transform_indices = @transform_1, window_bounds = array<i64: 8, 32>}, {pipeline_mode = #tpu.pipeline_mode<synchronous>, transform_indices = @transform_2, window_bounds = array<i64: 32, 32>}, {pipeline_mode = #tpu.pipeline_mode<synchronous>, transform_indices = @transform_3, window_bounds = array<i64: 1, 32>}, {pipeline_mode = #tpu.pipeline_mode<synchronous>, transform_indices = @transform_4, window_bounds = array<i64: 1, 32>}, {pipeline_mode = #tpu.pipeline_mode<synchronous>, transform_indices = @transform_5, window_bounds = array<i64: 1, 32>}, {pipeline_mode = #tpu.pipeline_mode<synchronous>, transform_indices = @transform_6, window_bounds = array<i64: 32, 128>}, {pipeline_mode = #tpu.pipeline_mode<synchronous>, transform_indices = @transform_7, window_bounds = array<i64: 1, 128>}, {pipeline_mode = #tpu.pipeline_mode<synchronous>, transform_indices = @transform_8, window_bounds = array<i64: 128, 32>}, {pipeline_mode = #tpu.pipeline_mode<synchronous>, transform_indices = @transform_9, window_bounds = array<i64: 1, 32>}, {transform_indices = @transform_10, window_bounds = array<i64: 8, 32>}]} {
    %c0 = arith.constant 0 : index
    %c0_0 = arith.constant 0 : index
    %0 = vector.load %arg1[%c0, %c0_0] : memref<8x32xf32, #tpu.memory_space<vmem>>, vector<8x32xf32>
    %c0_1 = arith.constant 0 : index
    %c0_2 = arith.constant 0 : index
    %1 = vector.load %arg3[%c0_1, %c0_2] : memref<32x32xf32, #tpu.memory_space<vmem>>, vector<32x32xf32>
    %cst = arith.constant dense<0.000000e+00> : vector<8x32xf32>
    %2 = tpu.matmul %0, %1, %cst {dimension_numbers = #tpu.dot_dimension_numbers<[1], [0], [0], [1], [0, 0, 1, 1], [], []>} : vector<8x32xf32>, vector<32x32xf32>, vector<8x32xf32> -> vector<8x32xf32>
    %c0_3 = arith.constant 0 : index
    %c0_4 = arith.constant 0 : index
    %3 = vector.load %arg4[%c0_3, %c0_4] : memref<1x32xf32, #tpu.memory_space<vmem>>, vector<1x32xf32>
    %4 = vector.broadcast %3 : vector<1x32xf32> to vector<8x32xf32>
    %5 = arith.addf %2, %4 : vector<8x32xf32>
    %c0_5 = arith.constant 0 : index
    %c0_6 = arith.constant 0 : index
    %6 = vector.load %arg2[%c0_5, %c0_6] : memref<8x32xf32, #tpu.memory_space<vmem>>, vector<8x32xf32>
    %7 = arith.addf %5, %6 : vector<8x32xf32>
    %cst_7 = arith.constant dense<0.000000e+00> : vector<8xf32>
    %8 = vector.multi_reduction <add>, %7, %cst_7 [1] : vector<8x32xf32> to vector<8xf32>
    %9 = vector.shape_cast %8 : vector<8xf32> to vector<8x1xf32>
    %cst_8 = arith.constant 3.200000e+01 : f32
    %10 = vector.broadcast %cst_8 : f32 to vector<8x1xf32>
    %11 = arith.divf %9, %10 : vector<8x1xf32>
    %12 = vector.broadcast %11 : vector<8x1xf32> to vector<8x32xf32>
    %13 = arith.subf %7, %12 : vector<8x32xf32>
    %14 = arith.mulf %13, %13 : vector<8x32xf32>
    %cst_9 = arith.constant dense<0.000000e+00> : vector<8xf32>
    %15 = vector.multi_reduction <add>, %14, %cst_9 [1] : vector<8x32xf32> to vector<8xf32>
    %16 = vector.shape_cast %15 : vector<8xf32> to vector<8x1xf32>
    %cst_10 = arith.constant 3.200000e+01 : f32
    %17 = vector.broadcast %cst_10 : f32 to vector<8x1xf32>
    %18 = arith.divf %16, %17 : vector<8x1xf32>
    %19 = vector.broadcast %11 : vector<8x1xf32> to vector<8x32xf32>
    %20 = arith.subf %7, %19 : vector<8x32xf32>
    %cst_11 = arith.constant 9.99999974E-6 : f32
    %21 = vector.broadcast %cst_11 : f32 to vector<8x1xf32>
    %22 = arith.addf %18, %21 : vector<8x1xf32>
    %23 = math.rsqrt %22 : vector<8x1xf32>
    %24 = vector.broadcast %23 : vector<8x1xf32> to vector<8x32xf32>
    %25 = arith.mulf %20, %24 : vector<8x32xf32>
    %c0_12 = arith.constant 0 : index
    %c0_13 = arith.constant 0 : index
    %26 = vector.load %arg5[%c0_12, %c0_13] : memref<1x32xf32, #tpu.memory_space<vmem>>, vector<1x32xf32>
    %27 = vector.broadcast %26 : vector<1x32xf32> to vector<8x32xf32>
    %28 = arith.mulf %25, %27 : vector<8x32xf32>
    %c0_14 = arith.constant 0 : index
    %c0_15 = arith.constant 0 : index
    %29 = vector.load %arg6[%c0_14, %c0_15] : memref<1x32xf32, #tpu.memory_space<vmem>>, vector<1x32xf32>
    %30 = vector.broadcast %29 : vector<1x32xf32> to vector<8x32xf32>
    %31 = arith.addf %28, %30 : vector<8x32xf32>
    %c0_16 = arith.constant 0 : index
    %c0_17 = arith.constant 0 : index
    %32 = vector.load %arg7[%c0_16, %c0_17] : memref<32x128xf32, #tpu.memory_space<vmem>>, vector<32x128xf32>
    %cst_18 = arith.constant dense<0.000000e+00> : vector<8x128xf32>
    %33 = tpu.matmul %31, %32, %cst_18 {dimension_numbers = #tpu.dot_dimension_numbers<[1], [0], [0], [1], [0, 0, 1, 1], [], []>} : vector<8x32xf32>, vector<32x128xf32>, vector<8x128xf32> -> vector<8x128xf32>
    %c0_19 = arith.constant 0 : index
    %c0_20 = arith.constant 0 : index
    %34 = vector.load %arg8[%c0_19, %c0_20] : memref<1x128xf32, #tpu.memory_space<vmem>>, vector<1x128xf32>
    %35 = vector.broadcast %34 : vector<1x128xf32> to vector<8x128xf32>
    %36 = arith.addf %33, %35 : vector<8x128xf32>
    %cst_21 = arith.constant 1.702000e+00 : f32
    %37 = vector.broadcast %cst_21 : f32 to vector<8x128xf32>
    %38 = arith.mulf %37, %36 : vector<8x128xf32>
    %39 = arith.negf %38 : vector<8x128xf32>
    %40 = math.exp %39 : vector<8x128xf32>
    %cst_22 = arith.constant 1.000000e+00 : f32
    %41 = vector.broadcast %cst_22 : f32 to vector<8x128xf32>
    %42 = arith.addf %41, %40 : vector<8x128xf32>
    %43 = arith.divf %41, %42 : vector<8x128xf32>
    %44 = arith.mulf %36, %43 : vector<8x128xf32>
    %c0_23 = arith.constant 0 : index
    %c0_24 = arith.constant 0 : index
    %45 = vector.load %arg9[%c0_23, %c0_24] : memref<128x32xf32, #tpu.memory_space<vmem>>, vector<128x32xf32>
    %cst_25 = arith.constant dense<0.000000e+00> : vector<8x32xf32>
    %46 = tpu.matmul %44, %45, %cst_25 {dimension_numbers = #tpu.dot_dimension_numbers<[1], [0], [0], [1], [0, 0, 1, 1], [], []>} : vector<8x128xf32>, vector<128x32xf32>, vector<8x32xf32> -> vector<8x32xf32>
    %c0_26 = arith.constant 0 : index
    %c0_27 = arith.constant 0 : index
    %47 = vector.load %arg10[%c0_26, %c0_27] : memref<1x32xf32, #tpu.memory_space<vmem>>, vector<1x32xf32>
    %48 = vector.broadcast %47 : vector<1x32xf32> to vector<8x32xf32>
    %49 = arith.addf %46, %48 : vector<8x32xf32>
    %50 = arith.addf %49, %7 : vector<8x32xf32>
    %c0_28 = arith.constant 0 : index
    %c0_29 = arith.constant 0 : index
    %51 = vector.load %arg11[%c0_28, %c0_29] : memref<8x32xf32, #tpu.memory_space<vmem>>, vector<8x32xf32>
    tpu.vector_store %arg11[%c0_28, %c0_29], %50 {strides = array<i32>} : memref<8x32xf32, #tpu.memory_space<vmem>>, vector<8x32xf32>,
    return
  }
  func.func @transform_0(%arg0: i32) -> (i32, i32) {
    %c0_i32 = arith.constant 0 : i32
    %c0_i32_0 = arith.constant 0 : i32
    return %arg0, %c0_i32 : i32, i32
  }
  func.func @transform_1(%arg0: i32) -> (i32, i32) {
    %c0_i32 = arith.constant 0 : i32
    %c0_i32_0 = arith.constant 0 : i32
    return %arg0, %c0_i32 : i32, i32
  }
  func.func @transform_2(%arg0: i32) -> (i32, i32) {
    %c0_i32 = arith.constant 0 : i32
    %c0_i32_0 = arith.constant 0 : i32
    %c0_i32_1 = arith.constant 0 : i32
    return %c0_i32, %c0_i32_0 : i32, i32
  }
  func.func @transform_3(%arg0: i32) -> (i32, i32) {
    %c0_i32 = arith.constant 0 : i32
    %c0_i32_0 = arith.constant 0 : i32
    %c0_i32_1 = arith.constant 0 : i32
    return %c0_i32, %c0_i32_0 : i32, i32
  }
  func.func @transform_4(%arg0: i32) -> (i32, i32) {
    %c0_i32 = arith.constant 0 : i32
    %c0_i32_0 = arith.constant 0 : i32
    %c0_i32_1 = arith.constant 0 : i32
    return %c0_i32, %c0_i32_0 : i32, i32
  }
  func.func @transform_5(%arg0: i32) -> (i32, i32) {
    %c0_i32 = arith.constant 0 : i32
    %c0_i32_0 = arith.constant 0 : i32
    %c0_i32_1 = arith.constant 0 : i32
    return %c0_i32, %c0_i32_0 : i32, i32
  }
  func.func @transform_6(%arg0: i32) -> (i32, i32) {
    %c0_i32 = arith.constant 0 : i32
    %c0_i32_0 = arith.constant 0 : i32
    %c0_i32_1 = arith.constant 0 : i32
    return %c0_i32, %c0_i32_0 : i32, i32
  }
  func.func @transform_7(%arg0: i32) -> (i32, i32) {
    %c0_i32 = arith.constant 0 : i32
    %c0_i32_0 = arith.constant 0 : i32
    %c0_i32_1 = arith.constant 0 : i32
    return %c0_i32, %c0_i32_0 : i32, i32
  }
  func.func @transform_8(%arg0: i32) -> (i32, i32) {
    %c0_i32 = arith.constant 0 : i32
    %c0_i32_0 = arith.constant 0 : i32
    %c0_i32_1 = arith.constant 0 : i32
    return %c0_i32, %c0_i32_0 : i32, i32
  }
  func.func @transform_9(%arg0: i32) -> (i32, i32) {
    %c0_i32 = arith.constant 0 : i32
    %c0_i32_0 = arith.constant 0 : i32
    %c0_i32_1 = arith.constant 0 : i32
    return %c0_i32, %c0_i32_0 : i32, i32
  }
  func.func @transform_10(%arg0: i32) -> (i32, i32) {
    %c0_i32 = arith.constant 0 : i32
    %c0_i32_0 = arith.constant 0 : i32
    return %arg0, %c0_i32 : i32, i32
  }
}

module attributes {stable_mosaic.version = 11 : i64} {
  func.func @_attn_kernel(%arg0: i32, %arg1: i32, %arg2: memref<1x8x32xf32, #tpu.memory_space<vmem>>, %arg3: memref<1x8x32xf32, #tpu.memory_space<vmem>>, %arg4: memref<1x8x32xf32, #tpu.memory_space<vmem>>, %arg5: memref<1x1x8x8xf32, #tpu.memory_space<vmem>>, %arg6: memref<1x8x32xf32, #tpu.memory_space<vmem>>) attributes {dimension_semantics = [#tpu.dimension_semantics<parallel>, #tpu.dimension_semantics<parallel>], iteration_bounds = array<i64: 2, 1>, scalar_prefetch = 0 : i64, scratch_operands = 0 : i64, tpu.core_type = #tpu.core_type<tc>, window_params = [{transform_indices = @transform_0, window_bounds = array<i64: 1, 8, 32>}, {transform_indices = @transform_1, window_bounds = array<i64: 1, 8, 32>}, {transform_indices = @transform_2, window_bounds = array<i64: 1, 8, 32>}, {transform_indices = @transform_3, window_bounds = array<i64: 1, 1, 8, 8>}, {transform_indices = @transform_4, window_bounds = array<i64: 1, 8, 32>}]} {
    %c0 = arith.constant 0 : index
    %c0_0 = arith.constant 0 : index
    %c0_1 = arith.constant 0 : index
    %c0_2 = arith.constant 0 : index
    %0 = vector.load %arg5[%c0, %c0_0, %c0_1, %c0_2] : memref<1x1x8x8xf32, #tpu.memory_space<vmem>>, vector<1x1x8x8xf32>
    %1 = vector.shape_cast %0 : vector<1x1x8x8xf32> to vector<8x8xf32>
    %c0_3 = arith.constant 0 : index
    %c0_4 = arith.constant 0 : index
    %c0_5 = arith.constant 0 : index
    %2 = vector.load %arg2[%c0_3, %c0_4, %c0_5] : memref<1x8x32xf32, #tpu.memory_space<vmem>>, vector<1x8x8xf32>
    %3 = vector.shape_cast %2 : vector<1x8x8xf32> to vector<8x8xf32>
    %c0_6 = arith.constant 0 : index
    %c0_7 = arith.constant 0 : index
    %c0_8 = arith.constant 0 : index
    %4 = vector.load %arg3[%c0_6, %c0_7, %c0_8] : memref<1x8x32xf32, #tpu.memory_space<vmem>>, vector<1x8x8xf32>
    %5 = vector.shape_cast %4 : vector<1x8x8xf32> to vector<8x8xf32>
    %c0_9 = arith.constant 0 : index
    %c0_10 = arith.constant 0 : index
    %c0_11 = arith.constant 0 : index
    %6 = vector.load %arg4[%c0_9, %c0_10, %c0_11] : memref<1x8x32xf32, #tpu.memory_space<vmem>>, vector<1x8x8xf32>
    %7 = vector.shape_cast %6 : vector<1x8x8xf32> to vector<8x8xf32>
    %cst = arith.constant dense<0.000000e+00> : vector<8x8xf32>
    %8 = tpu.matmul %3, %5, %cst {dimension_numbers = #tpu.dot_dimension_numbers<[1], [1], [0], [0], [0, 0, 1, 0], [], []>} : vector<8x8xf32>, vector<8x8xf32>, vector<8x8xf32> -> vector<8x8xf32>
    %9 = arith.addf %8, %1 : vector<8x8xf32>
    %cst_12 = arith.constant dense<0xFF800000> : vector<8xf32>
    %10 = vector.multi_reduction <maximumf>, %9, %cst_12 [1] : vector<8x8xf32> to vector<8xf32>
    %11 = vector.shape_cast %10 : vector<8xf32> to vector<8x1xf32>
    %12 = vector.broadcast %11 : vector<8x1xf32> to vector<8x8xf32>
    %13 = arith.subf %9, %12 : vector<8x8xf32>
    %14 = math.exp %13 : vector<8x8xf32>
    %cst_13 = arith.constant dense<0.000000e+00> : vector<8xf32>
    %15 = vector.multi_reduction <add>, %14, %cst_13 [1] : vector<8x8xf32> to vector<8xf32>
    %16 = vector.shape_cast %15 : vector<8xf32> to vector<8x1xf32>
    %cst_14 = arith.constant dense<0.000000e+00> : vector<8x8xf32>
    %17 = tpu.matmul %14, %7, %cst_14 {dimension_numbers = #tpu.dot_dimension_numbers<[1], [0], [0], [1], [0, 0, 1, 1], [], []>} : vector<8x8xf32>, vector<8x8xf32>, vector<8x8xf32> -> vector<8x8xf32>
    %18 = tpu.reciprocal %16 {approx = true} : vector<8x1xf32> -> vector<8x1xf32>
    %19 = vector.broadcast %18 : vector<8x1xf32> to vector<8x8xf32>
    %20 = arith.mulf %17, %19 : vector<8x8xf32>
    %c0_15 = arith.constant 0 : index
    %c0_16 = arith.constant 0 : index
    %c8 = arith.constant 8 : index
    %21 = vector.load %arg2[%c0_15, %c0_16, %c8] : memref<1x8x32xf32, #tpu.memory_space<vmem>>, vector<1x8x8xf32>
    %22 = vector.shape_cast %21 : vector<1x8x8xf32> to vector<8x8xf32>
    %c0_17 = arith.constant 0 : index
    %c0_18 = arith.constant 0 : index
    %c8_19 = arith.constant 8 : index
    %23 = vector.load %arg3[%c0_17, %c0_18, %c8_19] : memref<1x8x32xf32, #tpu.memory_space<vmem>>, vector<1x8x8xf32>
    %24 = vector.shape_cast %23 : vector<1x8x8xf32> to vector<8x8xf32>
    %c0_20 = arith.constant 0 : index
    %c0_21 = arith.constant 0 : index
    %c8_22 = arith.constant 8 : index
    %25 = vector.load %arg4[%c0_20, %c0_21, %c8_22] : memref<1x8x32xf32, #tpu.memory_space<vmem>>, vector<1x8x8xf32>
    %26 = vector.shape_cast %25 : vector<1x8x8xf32> to vector<8x8xf32>
    %cst_23 = arith.constant dense<0.000000e+00> : vector<8x8xf32>
    %27 = tpu.matmul %22, %24, %cst_23 {dimension_numbers = #tpu.dot_dimension_numbers<[1], [1], [0], [0], [0, 0, 1, 0], [], []>} : vector<8x8xf32>, vector<8x8xf32>, vector<8x8xf32> -> vector<8x8xf32>
    %28 = arith.addf %27, %1 : vector<8x8xf32>
    %cst_24 = arith.constant dense<0xFF800000> : vector<8xf32>
    %29 = vector.multi_reduction <maximumf>, %28, %cst_24 [1] : vector<8x8xf32> to vector<8xf32>
    %30 = vector.shape_cast %29 : vector<8xf32> to vector<8x1xf32>
    %31 = vector.broadcast %30 : vector<8x1xf32> to vector<8x8xf32>
    %32 = arith.subf %28, %31 : vector<8x8xf32>
    %33 = math.exp %32 : vector<8x8xf32>
    %cst_25 = arith.constant dense<0.000000e+00> : vector<8xf32>
    %34 = vector.multi_reduction <add>, %33, %cst_25 [1] : vector<8x8xf32> to vector<8xf32>
    %35 = vector.shape_cast %34 : vector<8xf32> to vector<8x1xf32>
    %cst_26 = arith.constant dense<0.000000e+00> : vector<8x8xf32>
    %36 = tpu.matmul %33, %26, %cst_26 {dimension_numbers = #tpu.dot_dimension_numbers<[1], [0], [0], [1], [0, 0, 1, 1], [], []>} : vector<8x8xf32>, vector<8x8xf32>, vector<8x8xf32> -> vector<8x8xf32>
    %37 = tpu.reciprocal %35 {approx = true} : vector<8x1xf32> -> vector<8x1xf32>
    %38 = vector.broadcast %37 : vector<8x1xf32> to vector<8x8xf32>
    %39 = arith.mulf %36, %38 : vector<8x8xf32>
    %c0_27 = arith.constant 0 : index
    %c0_28 = arith.constant 0 : index
    %c16 = arith.constant 16 : index
    %40 = vector.load %arg2[%c0_27, %c0_28, %c16] : memref<1x8x32xf32, #tpu.memory_space<vmem>>, vector<1x8x8xf32>
    %41 = vector.shape_cast %40 : vector<1x8x8xf32> to vector<8x8xf32>
    %c0_29 = arith.constant 0 : index
    %c0_30 = arith.constant 0 : index
    %c16_31 = arith.constant 16 : index
    %42 = vector.load %arg3[%c0_29, %c0_30, %c16_31] : memref<1x8x32xf32, #tpu.memory_space<vmem>>, vector<1x8x8xf32>
    %43 = vector.shape_cast %42 : vector<1x8x8xf32> to vector<8x8xf32>
    %c0_32 = arith.constant 0 : index
    %c0_33 = arith.constant 0 : index
    %c16_34 = arith.constant 16 : index
    %44 = vector.load %arg4[%c0_32, %c0_33, %c16_34] : memref<1x8x32xf32, #tpu.memory_space<vmem>>, vector<1x8x8xf32>
    %45 = vector.shape_cast %44 : vector<1x8x8xf32> to vector<8x8xf32>
    %cst_35 = arith.constant dense<0.000000e+00> : vector<8x8xf32>
    %46 = tpu.matmul %41, %43, %cst_35 {dimension_numbers = #tpu.dot_dimension_numbers<[1], [1], [0], [0], [0, 0, 1, 0], [], []>} : vector<8x8xf32>, vector<8x8xf32>, vector<8x8xf32> -> vector<8x8xf32>
    %47 = arith.addf %46, %1 : vector<8x8xf32>
    %cst_36 = arith.constant dense<0xFF800000> : vector<8xf32>
    %48 = vector.multi_reduction <maximumf>, %47, %cst_36 [1] : vector<8x8xf32> to vector<8xf32>
    %49 = vector.shape_cast %48 : vector<8xf32> to vector<8x1xf32>
    %50 = vector.broadcast %49 : vector<8x1xf32> to vector<8x8xf32>
    %51 = arith.subf %47, %50 : vector<8x8xf32>
    %52 = math.exp %51 : vector<8x8xf32>
    %cst_37 = arith.constant dense<0.000000e+00> : vector<8xf32>
    %53 = vector.multi_reduction <add>, %52, %cst_37 [1] : vector<8x8xf32> to vector<8xf32>
    %54 = vector.shape_cast %53 : vector<8xf32> to vector<8x1xf32>
    %cst_38 = arith.constant dense<0.000000e+00> : vector<8x8xf32>
    %55 = tpu.matmul %52, %45, %cst_38 {dimension_numbers = #tpu.dot_dimension_numbers<[1], [0], [0], [1], [0, 0, 1, 1], [], []>} : vector<8x8xf32>, vector<8x8xf32>, vector<8x8xf32> -> vector<8x8xf32>
    %56 = tpu.reciprocal %54 {approx = true} : vector<8x1xf32> -> vector<8x1xf32>
    %57 = vector.broadcast %56 : vector<8x1xf32> to vector<8x8xf32>
    %58 = arith.mulf %55, %57 : vector<8x8xf32>
    %c0_39 = arith.constant 0 : index
    %c0_40 = arith.constant 0 : index
    %c24 = arith.constant 24 : index
    %59 = vector.load %arg2[%c0_39, %c0_40, %c24] : memref<1x8x32xf32, #tpu.memory_space<vmem>>, vector<1x8x8xf32>
    %60 = vector.shape_cast %59 : vector<1x8x8xf32> to vector<8x8xf32>
    %c0_41 = arith.constant 0 : index
    %c0_42 = arith.constant 0 : index
    %c24_43 = arith.constant 24 : index
    %61 = vector.load %arg3[%c0_41, %c0_42, %c24_43] : memref<1x8x32xf32, #tpu.memory_space<vmem>>, vector<1x8x8xf32>
    %62 = vector.shape_cast %61 : vector<1x8x8xf32> to vector<8x8xf32>
    %c0_44 = arith.constant 0 : index
    %c0_45 = arith.constant 0 : index
    %c24_46 = arith.constant 24 : index
    %63 = vector.load %arg4[%c0_44, %c0_45, %c24_46] : memref<1x8x32xf32, #tpu.memory_space<vmem>>, vector<1x8x8xf32>
    %64 = vector.shape_cast %63 : vector<1x8x8xf32> to vector<8x8xf32>
    %cst_47 = arith.constant dense<0.000000e+00> : vector<8x8xf32>
    %65 = tpu.matmul %60, %62, %cst_47 {dimension_numbers = #tpu.dot_dimension_numbers<[1], [1], [0], [0], [0, 0, 1, 0], [], []>} : vector<8x8xf32>, vector<8x8xf32>, vector<8x8xf32> -> vector<8x8xf32>
    %66 = arith.addf %65, %1 : vector<8x8xf32>
    %cst_48 = arith.constant dense<0xFF800000> : vector<8xf32>
    %67 = vector.multi_reduction <maximumf>, %66, %cst_48 [1] : vector<8x8xf32> to vector<8xf32>
    %68 = vector.shape_cast %67 : vector<8xf32> to vector<8x1xf32>
    %69 = vector.broadcast %68 : vector<8x1xf32> to vector<8x8xf32>
    %70 = arith.subf %66, %69 : vector<8x8xf32>
    %71 = math.exp %70 : vector<8x8xf32>
    %cst_49 = arith.constant dense<0.000000e+00> : vector<8xf32>
    %72 = vector.multi_reduction <add>, %71, %cst_49 [1] : vector<8x8xf32> to vector<8xf32>
    %73 = vector.shape_cast %72 : vector<8xf32> to vector<8x1xf32>
    %cst_50 = arith.constant dense<0.000000e+00> : vector<8x8xf32>
    %74 = tpu.matmul %71, %64, %cst_50 {dimension_numbers = #tpu.dot_dimension_numbers<[1], [0], [0], [1], [0, 0, 1, 1], [], []>} : vector<8x8xf32>, vector<8x8xf32>, vector<8x8xf32> -> vector<8x8xf32>
    %75 = tpu.reciprocal %73 {approx = true} : vector<8x1xf32> -> vector<8x1xf32>
    %76 = vector.broadcast %75 : vector<8x1xf32> to vector<8x8xf32>
    %77 = arith.mulf %74, %76 : vector<8x8xf32>
    %78 = tpu.concatenate %20, %39, %58, %77 in 1 : vector<8x8xf32>, vector<8x8xf32>, vector<8x8xf32>, vector<8x8xf32> -> vector<8x32xf32>
    %79 = vector.shape_cast %78 : vector<8x32xf32> to vector<1x8x32xf32>
    %c0_51 = arith.constant 0 : index
    %c0_52 = arith.constant 0 : index
    %c0_53 = arith.constant 0 : index
    %80 = vector.load %arg6[%c0_51, %c0_52, %c0_53] : memref<1x8x32xf32, #tpu.memory_space<vmem>>, vector<1x8x32xf32>
    tpu.vector_store %arg6[%c0_51, %c0_52, %c0_53], %79 {strides = array<i32>} : memref<1x8x32xf32, #tpu.memory_space<vmem>>, vector<1x8x32xf32>,
    return
  }
  func.func @transform_0(%arg0: i32, %arg1: i32) -> (i32, i32, i32) {
    %c0_i32 = arith.constant 0 : i32
    %c0_i32_0 = arith.constant 0 : i32
    return %arg0, %c0_i32, %arg1 : i32, i32, i32
  }
  func.func @transform_1(%arg0: i32, %arg1: i32) -> (i32, i32, i32) {
    %c0_i32 = arith.constant 0 : i32
    %c0_i32_0 = arith.constant 0 : i32
    return %arg0, %c0_i32, %arg1 : i32, i32, i32
  }
  func.func @transform_2(%arg0: i32, %arg1: i32) -> (i32, i32, i32) {
    %c0_i32 = arith.constant 0 : i32
    %c0_i32_0 = arith.constant 0 : i32
    return %arg0, %c0_i32, %arg1 : i32, i32, i32
  }
  func.func @transform_3(%arg0: i32, %arg1: i32) -> (i32, i32, i32, i32) {
    %c0_i32 = arith.constant 0 : i32
    %c0_i32_0 = arith.constant 0 : i32
    %c0_i32_1 = arith.constant 0 : i32
    %c0_i32_2 = arith.constant 0 : i32
    return %arg0, %c0_i32, %c0_i32_0, %c0_i32_1 : i32, i32, i32, i32
  }
  func.func @transform_4(%arg0: i32, %arg1: i32) -> (i32, i32, i32) {
    %c0_i32 = arith.constant 0 : i32
    %c0_i32_0 = arith.constant 0 : i32
    return %arg0, %c0_i32, %arg1 : i32, i32, i32
  }
}

</mosaic_0001>

<llo_original>
// kernel: clip_encoder_layer.3
$region0: #{clip_encoder_layer.3}
  #allocation0 [shape = 'u32[]', space=smem, size = 0x4, offset = 0x4, fixed_abs, tag = 'smem constant byte address 0x4 - core index']
  #allocation1 [shape = 'u32[144,128]{1,0:T(1,128)}', space=vmem, size = 0x12000, scoped, tag = 'internal scratch']
  %s0 = inlined_call_operand.vmem [shape: f32[16,32], index: 0, kind: input, shape index: {}]
  %s1 = inlined_call_operand.vmem [shape: f32[1,32], index: 1, kind: input, shape index: {}]
  %s2 = inlined_call_operand.vmem [shape: f32[1,32], index: 2, kind: input, shape index: {}]
  %s3 = inlined_call_operand.vmem [shape: f32[32,96], index: 3, kind: input, shape index: {}]
  %s4 = inlined_call_operand.vmem [shape: f32[1,96], index: 4, kind: input, shape index: {}]
  %s5 = inlined_call_operand.vmem [shape: f32[16,32], index: 5, kind: output, shape index: {0}]
  %s6 = inlined_call_operand.vmem [shape: f32[16,32], index: 6, kind: output, shape index: {1}]
  %s7 = inlined_call_operand.vmem [shape: f32[16,32], index: 7, kind: output, shape index: {2}]
  %8 = xla_tuple %s5, %s6, %s7
  %s9 = sld [smem:[#allocation0]]
  $region69: #{clip_encoder_layer.3} parent=0
    _
  %s11 = ssub.s32 1, %s9
  %s12 = scalar_select 0, %s11, %s9
  loop: start=0, step=1, limit=4
  $region2: #{clip_encoder_layer.3} parent=0 // loop_pre_header
    _
  $region3: #{clip_encoder_layer.3} parent=0 // loop_header
    %s14 = sphi 0, %s18
    %p15 = scmp.ge.s32.totalorder %s14, 4
    %s24 = sphi 0, %s26
    %s27 = sphi 0, %s24
    %s28 = sphi 0, %s27
    %s44 = sphi 0, %s28
    %s48 = sphi 0, %s48
    %s50 = sphi 0, %s48
    %s51 = sphi 0, %s50
    %s65 = sphi 0, %s51
    %s69 = sphi 0, %s69
    %s71 = sphi 0, %s69
    %s72 = sphi 0, %s71
    %s86 = sphi 0, %s72
    %s90 = sphi 0, %s90
    %s92 = sphi 0, %s90
    %s93 = sphi 0, %s92
    %s107 = sphi 0, %s93
    %s111 = sphi 0, %s111
    %s113 = sphi 0, %s111
    %s114 = sphi 0, %s113
    %s128 = sphi 0, %s114
    %s134 = sphi 0, %s136
    %s137 = sphi 0, %s134
    %s138 = sphi 0, %s137
    %s154 = sphi 0, %s138
    %s160 = sphi 0, %s162
    %s163 = sphi 0, %s160
    %s164 = sphi 0, %s163
    %s180 = sphi 0, %s164
    %s186 = sphi 0, %s188
    %s189 = sphi 0, %s186
    %s190 = sphi 0, %s189
    %s206 = sphi 0, %s190
  $region4: #{clip_encoder_layer.3} parent=0 // loop_header_branch
    %17 = sbr.rel (%p15) target = $region8
  $region5: #{clip_encoder_layer.3} parent=0 // loop_body
    %s19 = ssub.s32 %s14, 1
    %s20 = ssub.s32 %s14, 2
    %s21 = sadd.s32 %s14, 1
    %s22 = ssub.s32 %s14, %s21
    %p23 = scmp.eq.s32.totalorder %s22, 0
    %s25 = sadd.s32 %s24, 1
    %s26 = scalar_select %p23, %s24, %s25
    %p29 = pneg %p23
    %p30 = scmp.eq.s32.totalorder %s14, 1
    %p31 = por %p29, %p30
    %p32 = scmp.ne.s32.totalorder %s24, %s27
    %p33 = scmp.eq.s32.totalorder %s14, 0
    %p34 = por %p32, %p33
    %p35 = scmp.ne.s32.totalorder %s24, %s27
    %p36 = scmp.eq.s32.totalorder %s19, 1
    %p37 = por %p35, %p36
    %p38 = scmp.ne.s32.totalorder %s27, %s28
    %p39 = scmp.eq.s32.totalorder %s19, 0
    %p40 = por %p38, %p39
    %p41 = scmp.ne.s32.totalorder %s27, %s28
    %p42 = scmp.eq.s32.totalorder %s20, 1
    %p43 = por %p41, %p42
    %p45 = scmp.ne.s32.totalorder %s28, %s44
    %p46 = scmp.eq.s32.totalorder %s20, 0
    %p47 = por %p45, %p46
    %s49 = sadd.s32 %s48, 1
    %p52 = scmp.eq.s32.totalorder %s14, 1
    %p53 = scmp.ne.s32.totalorder %s48, %s50
    %p54 = scmp.eq.s32.totalorder %s14, 0
    %p55 = por %p53, %p54
    %p56 = scmp.ne.s32.totalorder %s48, %s50
    %p57 = scmp.eq.s32.totalorder %s19, 1
    %p58 = por %p56, %p57
    %p59 = scmp.ne.s32.totalorder %s50, %s51
    %p60 = scmp.eq.s32.totalorder %s19, 0
    %p61 = por %p59, %p60
    %p62 = scmp.ne.s32.totalorder %s50, %s51
    %p63 = scmp.eq.s32.totalorder %s20, 1
    %p64 = por %p62, %p63
    %p66 = scmp.ne.s32.totalorder %s51, %s65
    %p67 = scmp.eq.s32.totalorder %s20, 0
    %p68 = por %p66, %p67
    %s70 = sadd.s32 %s69, 1
    %p73 = scmp.eq.s32.totalorder %s14, 1
    %p74 = scmp.ne.s32.totalorder %s69, %s71
    %p75 = scmp.eq.s32.totalorder %s14, 0
    %p76 = por %p74, %p75
    %p77 = scmp.ne.s32.totalorder %s69, %s71
    %p78 = scmp.eq.s32.totalorder %s19, 1
    %p79 = por %p77, %p78
    %p80 = scmp.ne.s32.totalorder %s71, %s72
    %p81 = scmp.eq.s32.totalorder %s19, 0
    %p82 = por %p80, %p81
    %p83 = scmp.ne.s32.totalorder %s71, %s72
    %p84 = scmp.eq.s32.totalorder %s20, 1
    %p85 = por %p83, %p84
    %p87 = scmp.ne.s32.totalorder %s72, %s86
    %p88 = scmp.eq.s32.totalorder %s20, 0
    %p89 = por %p87, %p88
    %s91 = sadd.s32 %s90, 1
    %p94 = scmp.eq.s32.totalorder %s14, 1
    %p95 = scmp.ne.s32.totalorder %s90, %s92
    %p96 = scmp.eq.s32.totalorder %s14, 0
    %p97 = por %p95, %p96
    %p98 = scmp.ne.s32.totalorder %s90, %s92
    %p99 = scmp.eq.s32.totalorder %s19, 1
    %p100 = por %p98, %p99
    %p101 = scmp.ne.s32.totalorder %s92, %s93
    %p102 = scmp.eq.s32.totalorder %s19, 0
    %p103 = por %p101, %p102
    %p104 = scmp.ne.s32.totalorder %s92, %s93
    %p105 = scmp.eq.s32.totalorder %s20, 1
    %p106 = por %p104, %p105
    %p108 = scmp.ne.s32.totalorder %s93, %s107
    %p109 = scmp.eq.s32.totalorder %s20, 0
    %p110 = por %p108, %p109
    %s112 = sadd.s32 %s111, 1
    %p115 = scmp.eq.s32.totalorder %s14, 1
    %p116 = scmp.ne.s32.totalorder %s111, %s113
    %p117 = scmp.eq.s32.totalorder %s14, 0
    %p118 = por %p116, %p117
    %p119 = scmp.ne.s32.totalorder %s111, %s113
    %p120 = scmp.eq.s32.totalorder %s19, 1
    %p121 = por %p119, %p120
    %p122 = scmp.ne.s32.totalorder %s113, %s114
    %p123 = scmp.eq.s32.totalorder %s19, 0
    %p124 = por %p122, %p123
    %p125 = scmp.ne.s32.totalorder %s113, %s114
    %p126 = scmp.eq.s32.totalorder %s20, 1
    %p127 = por %p125, %p126
    %p129 = scmp.ne.s32.totalorder %s114, %s128
    %p130 = scmp.eq.s32.totalorder %s20, 0
    %p131 = por %p129, %p130
    %s132 = ssub.s32 %s14, %s21
    %p133 = scmp.eq.s32.totalorder %s132, 0
    %s135 = sadd.s32 %s134, 1
    %s136 = scalar_select %p133, %s134, %s135
    %p139 = pneg %p133
    %p140 = scmp.eq.s32.totalorder %s14, 1
    %p141 = por %p139, %p140
    %p142 = scmp.ne.s32.totalorder %s134, %s137
    %p143 = scmp.eq.s32.totalorder %s14, 0
    %p144 = por %p142, %p143
    %p145 = scmp.ne.s32.totalorder %s134, %s137
    %p146 = scmp.eq.s32.totalorder %s19, 1
    %p147 = por %p145, %p146
    %p148 = scmp.ne.s32.totalorder %s137, %s138
    %p149 = scmp.eq.s32.totalorder %s19, 0
    %p150 = por %p148, %p149
    %p151 = scmp.ne.s32.totalorder %s137, %s138
    %p152 = scmp.eq.s32.totalorder %s20, 1
    %p153 = por %p151, %p152
    %p155 = scmp.ne.s32.totalorder %s138, %s154
    %p156 = scmp.eq.s32.totalorder %s20, 0
    %p157 = por %p155, %p156
    %s158 = ssub.s32 %s14, %s21
    %p159 = scmp.eq.s32.totalorder %s158, 0
    %s161 = sadd.s32 %s160, 1
    %s162 = scalar_select %p159, %s160, %s161
    %p165 = pneg %p159
    %p166 = scmp.eq.s32.totalorder %s14, 1
    %p167 = por %p165, %p166
    %p168 = scmp.ne.s32.totalorder %s160, %s163
    %p169 = scmp.eq.s32.totalorder %s14, 0
    %p170 = por %p168, %p169
    %p171 = scmp.ne.s32.totalorder %s160, %s163
    %p172 = scmp.eq.s32.totalorder %s19, 1
    %p173 = por %p171, %p172
    %p174 = scmp.ne.s32.totalorder %s163, %s164
    %p175 = scmp.eq.s32.totalorder %s19, 0
    %p176 = por %p174, %p175
    %p177 = scmp.ne.s32.totalorder %s163, %s164
    %p178 = scmp.eq.s32.totalorder %s20, 1
    %p179 = por %p177, %p178
    %p181 = scmp.ne.s32.totalorder %s164, %s180
    %p182 = scmp.eq.s32.totalorder %s20, 0
    %p183 = por %p181, %p182
    %s184 = ssub.s32 %s14, %s21
    %p185 = scmp.eq.s32.totalorder %s184, 0
    %s187 = sadd.s32 %s186, 1
    %s188 = scalar_select %p185, %s186, %s187
    %p191 = pneg %p185
    %p192 = scmp.eq.s32.totalorder %s14, 1
    %p193 = por %p191, %p192
    %p194 = scmp.ne.s32.totalorder %s186, %s189
    %p195 = scmp.eq.s32.totalorder %s14, 0
    %p196 = por %p194, %p195
    %p197 = scmp.ne.s32.totalorder %s186, %s189
    %p198 = scmp.eq.s32.totalorder %s19, 1
    %p199 = por %p197, %p198
    %p200 = scmp.ne.s32.totalorder %s189, %s190
    %p201 = scmp.eq.s32.totalorder %s19, 0
    %p202 = por %p200, %p201
    %p203 = scmp.ne.s32.totalorder %s189, %s190
    %p204 = scmp.eq.s32.totalorder %s20, 1
    %p205 = por %p203, %p204
    %p207 = scmp.ne.s32.totalorder %s190, %s206
    %p208 = scmp.eq.s32.totalorder %s20, 0
    %p209 = por %p207, %p208
    %p210 = scmp.le.s32.totalorder 1, %s14
    %p211 = scmp.lt.s32.totalorder %s14, 3
    %p212 = pnand %p210, %p211
    %p213 = pneg %p212
    // Predicated region
    $region9: #{clip_encoder_layer.3} parent=5 // pred_check
      _
    $region10: #{clip_encoder_layer.3} parent=5 // pred_check_branch
      %215 = sbr.rel (%p212) target = $region12
    $region11: #{clip_encoder_layer.3} parent=5 // pred_region
      %s216 = ssub.s32 %s14, 1
      // Predicated region
      $region13: #{clip_encoder_layer.3} parent=11 // pred_check
        %p217 = pneg %p61
      $region14: #{clip_encoder_layer.3} parent=11 // pred_check_branch
        %219 = sbr.rel (%p217) target = $region16
      $region15: #{clip_encoder_layer.3} parent=11 // pred_region
        _
      $region16: #{clip_encoder_layer.3} parent=11 // pred_fallthru
        _
      // Predicated region
      $region17: #{clip_encoder_layer.3} parent=11 // pred_check
        %p220 = pneg %p82
      $region18: #{clip_encoder_layer.3} parent=11 // pred_check_branch
        %222 = sbr.rel (%p220) target = $region20
      $region19: #{clip_encoder_layer.3} parent=11 // pred_region
        _
      $region20: #{clip_encoder_layer.3} parent=11 // pred_fallthru
        _
      // Predicated region
      $region21: #{clip_encoder_layer.3} parent=11 // pred_check
        %p223 = pneg %p103
      $region22: #{clip_encoder_layer.3} parent=11 // pred_check_branch
        %225 = sbr.rel (%p223) target = $region24
      $region23: #{clip_encoder_layer.3} parent=11 // pred_region
        _
      $region24: #{clip_encoder_layer.3} parent=11 // pred_fallthru
        _
      // Predicated region
      $region25: #{clip_encoder_layer.3} parent=11 // pred_check
        %p226 = pneg %p124
      $region26: #{clip_encoder_layer.3} parent=11 // pred_check_branch
        %228 = sbr.rel (%p226) target = $region28
      $region27: #{clip_encoder_layer.3} parent=11 // pred_region
        _
      $region28: #{clip_encoder_layer.3} parent=11 // pred_fallthru
        _
    $region12: #{clip_encoder_layer.3} parent=5 // pred_fallthru
      _
    %p229 = scmp.lt.s32.totalorder %s14, 2
    // Predicated region
    $region29: #{clip_encoder_layer.3} parent=5 // pred_check
      %p230 = pneg %p229
    $region30: #{clip_encoder_layer.3} parent=5 // pred_check_branch
      %232 = sbr.rel (%p230) target = $region32
    $region31: #{clip_encoder_layer.3} parent=5 // pred_region
      // Predicated region
      $region33: #{clip_encoder_layer.3} parent=31 // pred_check
        %p233 = pneg %p34
      $region34: #{clip_encoder_layer.3} parent=31 // pred_check_branch
        %235 = sbr.rel (%p233) target = $region36
      $region35: #{clip_encoder_layer.3} parent=31 // pred_region
        %p236 = scmp.lt.s32.totalorder %s14, 1
        %s237 = scalar_select %p236, %s14, 1
        %s238 = smul.addr %s237, 8
        %s239 = scalar_lea.vmem %s0, %s238
      $region36: #{clip_encoder_layer.3} parent=31 // pred_fallthru
        _
    $region32: #{clip_encoder_layer.3} parent=5 // pred_fallthru
      _
    %p240 = scmp.le.s32.totalorder 1, %s14
    %p241 = scmp.lt.s32.totalorder %s14, 3
    %p242 = pnand %p240, %p241
    %p243 = pneg %p242
    // Predicated region
    $region37: #{clip_encoder_layer.3} parent=5 // pred_check
      _
    $region38: #{clip_encoder_layer.3} parent=5 // pred_check_branch
      %245 = sbr.rel (%p242) target = $region40
    $region39: #{clip_encoder_layer.3} parent=5 // pred_region
      %s246 = ssub.s32 %s14, 1
      %p247 = scmp.lt.s32.totalorder %s19, 1
      %s248 = scalar_select %p247, %s19, 1
      %s249 = smul.addr %s248, 8
      %s250 = scalar_lea.vmem %s0, %s249
      %p251 = pneg %p40
      %p252 = pneg %p37
      %p253 = pneg %p61
      %p254 = pneg %p58
      %p255 = pneg %p82
      %p256 = pneg %p79
      %p257 = pneg %p103
      %p258 = pneg %p100
      %p259 = pneg %p124
      %p260 = pneg %p121
      %p261 = pneg %p150
      %p262 = pneg %p147
      %p263 = scmp.lt.s32.totalorder %s19, 1
      %s264 = scalar_select %p263, %s19, 1
      %s265 = smul.addr %s264, 8
      %s266 = scalar_lea.vmem %s5, %s265
      %p267 = pneg %p176
      %p268 = pneg %p173
      %p269 = scmp.lt.s32.totalorder %s19, 1
      %s270 = scalar_select %p269, %s19, 1
      %s271 = smul.addr %s270, 8
      %s272 = scalar_lea.vmem %s6, %s271
      %p273 = pneg %p202
      %p274 = pneg %p199
      %p275 = scmp.lt.s32.totalorder %s19, 1
      %s276 = scalar_select %p275, %s19, 1
      %s277 = smul.addr %s276, 8
      %s278 = scalar_lea.vmem %s7, %s277
      %p279 = scmp.lt.s32.totalorder %s19, 1
      %s280 = scalar_select %p279, %s19, 1
      %s281 = smul.addr %s280, 8
      %s282 = scalar_lea.vmem %s0, %s281
      %p283 = scmp.lt.s32.totalorder %s19, 1
      %s284 = scalar_select %p283, %s19, 1
      %s285 = smul.addr %s284, 8
      %s286 = scalar_lea.vmem %s5, %s285
      %p287 = scmp.lt.s32.totalorder %s19, 1
      %s288 = scalar_select %p287, %s19, 1
      %s289 = smul.addr %s288, 8
      %s290 = scalar_lea.vmem %s6, %s289
      %p291 = scmp.lt.s32.totalorder %s19, 1
      %s292 = scalar_select %p291, %s19, 1
      %s293 = smul.addr %s292, 8
      %s294 = scalar_lea.vmem %s7, %s293
      %v295 = vld [vmem:[%s282] sm:$0xff]
      %vm296 = vcmask 261120
      %v297 = vsel %vm296, %v295, 0.0
      %298 = vadd.xlane.f32.xlu0 %v297
      %v299 = vpop.xlane.xlu0 %298
      %v300 = vrcp.pop 32.0
      %v301 = vmul.f32 %v299, %v300
      %v302 = vsub.f32 %v295, %v301
      %v303 = vmul.f32 %v302, %v302
      %v304 = vsel %vm296, %v303, 0.0
      %305 = vadd.xlane.f32.xlu0 %v304
      %v306 = vpop.xlane.xlu0 %305
      %v307 = vmul.f32 %v306, %v300
      %v308 = vadd.f32 %v307, 1e-05
      %v309 = vrsqrt.pop %v308
      %v310 = vmul.f32 %v302, %v309
      %v311 = vld [vmem:[%s1] sm:$0x1]
      %v313 = vlaneseq
      %v314 = vshrl.u32 %v313, 7
      %v315 = vsub.s32 0, %v314
      %v316 = vrot.slane %v311, %v315
      %v318 = vmul.f32 %v310, %v316
      %v319 = vld [vmem:[%s2] sm:$0x1]
      %v321 = vlaneseq
      %v322 = vshrl.u32 %v321, 7
      %v323 = vsub.s32 0, %v322
      %v324 = vrot.slane %v319, %v323
      %v326 = vadd.f32 %v318, %v324
      %v327 = vld [vmem:[%s3] sm:$0xff]
      %v328 = vld [vmem:[%s3 + $0x8] sm:$0xff]
      %v329 = vld [vmem:[%s3 + $0x10] sm:$0xff]
      %v330 = vld [vmem:[%s3 + $0x18] sm:$0xff]
      %v331 = vld [vmem:[%s4] sm:$0x1]
      %v333 = vlaneseq
      %v334 = vshrl.u32 %v333, 7
      %v335 = vsub.s32 0, %v334
      %v336 = vrot.slane %v331, %v335
      %v339 = vsel %vm296, %v326, 0
      %341 = vmatprep.subr.mxu0 0.0
      %342 = vmatpush1.msra.mxu0 %v327
      %343 = vmatprep.subr.mxu0 0.0
      %344 = vmatpush1.msra.mxu0 %v328
      %345 = vmatprep.subr.mxu0 0.0
      %346 = vmatpush1.msra.mxu0 %v329
      %347 = vmatprep.subr.mxu0 0.0
      %348 = vmatpush1.msra.mxu0 %v330
      %349 = vmatprep.subr.mxu0 0.0
      %350 = vmatpush1.msra.mxu0 0.0
      %351 = vmatprep.subr.mxu0 0.0
      %352 = vmatpush1.msra.mxu0 0.0
      %353 = vmatprep.subr.mxu0 0.0
      %354 = vmatpush1.msra.mxu0 0.0
      %355 = vmatprep.subr.mxu0 0.0
      %356 = vmatpush1.msra.mxu0 0.0
      %357 = vmatprep.subr.mxu0 0.0
      %358 = vmatpush1.msra.mxu0 0.0
      %359 = vmatprep.subr.mxu0 0.0
      %360 = vmatpush1.msra.mxu0 0.0
      %361 = vmatprep.subr.mxu0 0.0
      %362 = vmatpush1.msra.mxu0 0.0
      %363 = vmatprep.subr.mxu0 0.0
      %364 = vmatpush1.msra.mxu0 0.0
      %365 = vmatprep.subr.mxu0 0.0
      %366 = vmatpush1.msra.mxu0 0.0
      %367 = vmatprep.subr.mxu0 0.0
      %368 = vmatpush1.msra.mxu0 0.0
      %369 = vmatprep.subr.mxu0 0.0
      %370 = vmatpush1.msra.mxu0 0.0
      %371 = vmatprep.subr.mxu0 0.0
      %372 = vmatpush1.msra.mxu0 0.0
      %373 = vmatprep.subr.mxu0 0.0
      %374 = vmatpush1.msra.mxu0 0.0
      %375 = vmatprep.subr.mxu0 0.0
      %376 = vmatpush1.msra.mxu0 0.0
      %377 = vmatprep.subr.mxu0 0.0
      %378 = vmatpush1.msra.mxu0 0.0
      %379 = vmatprep.subr.mxu0 0.0
      %380 = vmatpush1.msra.mxu0 0.0
      %381 = vmatprep.subr.mxu0 0.0
      %382 = vmatpush1.msra.mxu0 0.0
      %383 = vmatprep.subr.mxu0 0.0
      %384 = vmatpush1.msra.mxu0 0.0
      %385 = vmatprep.subr.mxu0 0.0
      %386 = vmatpush1.msra.mxu0 0.0
      %387 = vmatprep.subr.mxu0 0.0
      %388 = vmatpush1.msra.mxu0 0.0
      %389 = vmatprep.subr.mxu0 0.0
      %390 = vmatpush1.msra.mxu0 0.0
      %391 = vmatprep.subr.mxu0 0.0
      %392 = vmatpush1.msra.mxu0 0.0
      %393 = vmatprep.subr.mxu0 0.0
      %394 = vmatpush1.msra.mxu0 0.0
      %395 = vmatprep.subr.mxu0 0.0
      %396 = vmatpush1.msra.mxu0 0.0
      %397 = vmatprep.subr.mxu0 0.0
      %398 = vmatpush1.msra.mxu0 0.0
      %399 = vmatprep.subr.mxu0 0.0
      %400 = vmatpush1.msra.mxu0 0.0
      %401 = vmatprep.subr.mxu0 0.0
      %402 = vmatpush1.msra.mxu0 0.0
      %403 = vmatprep.subr.mxu0 0.0
      %404 = vmatpush1.msra.mxu0 0.0
      %405 = vmatprep.mubr.f32.mxu0 0.0
      %406 = vmatmul.mubr.f32.gmra.mrb[0].mxu0 %v339
      %v407 = vpop.f32.mrb[0].mxu0
      %v408 = vadd.f32 %v336, %v407
      %v409 = vpop.f32.mrb[0].mxu0
      %410 = vdwg.mxu0
      %411 = vst.msk [vmem:[%s286] sm:$0xff] %vm296, %v408
      %413 = vrot.lane.b32.xlu0 %v408, 96
      %v414 = vpop.permute.xlu0 %413
      %416 = vst.msk [vmem:[%s290] sm:$0xff] %vm296, %v414
      %417 = vrot.lane.b32.xlu0 %v408, 64
      %v418 = vpop.permute.xlu0 %417
      %420 = vst.msk [vmem:[%s294] sm:$0xff] %vm296, %v418
      %p421 = scmp.lt.s32.totalorder %s19, 1
      %s422 = scalar_select %p421, %s19, 1
      %s423 = smul.addr %s422, 8
      %s424 = scalar_lea.vmem %s5, %s423
      %p425 = scmp.lt.s32.totalorder %s19, 1
      %s426 = scalar_select %p425, %s19, 1
      %s427 = smul.addr %s426, 8
      %s428 = scalar_lea.vmem %s6, %s427
      %p429 = scmp.lt.s32.totalorder %s19, 1
      %s430 = scalar_select %p429, %s19, 1
      %s431 = smul.addr %s430, 8
      %s432 = scalar_lea.vmem %s7, %s431
      // Predicated region
      $region41: #{clip_encoder_layer.3} parent=39 // pred_check
        %p433 = pneg %p147
      $region42: #{clip_encoder_layer.3} parent=39 // pred_check_branch
        %435 = sbr.rel (%p433) target = $region44
      $region43: #{clip_encoder_layer.3} parent=39 // pred_region
        _
      $region44: #{clip_encoder_layer.3} parent=39 // pred_fallthru
        _
      // Predicated region
      $region45: #{clip_encoder_layer.3} parent=39 // pred_check
        %p436 = pneg %p173
      $region46: #{clip_encoder_layer.3} parent=39 // pred_check_branch
        %438 = sbr.rel (%p436) target = $region48
      $region47: #{clip_encoder_layer.3} parent=39 // pred_region
        _
      $region48: #{clip_encoder_layer.3} parent=39 // pred_fallthru
        _
      // Predicated region
      $region49: #{clip_encoder_layer.3} parent=39 // pred_check
        %p439 = pneg %p199
      $region50: #{clip_encoder_layer.3} parent=39 // pred_check_branch
        %441 = sbr.rel (%p439) target = $region52
      $region51: #{clip_encoder_layer.3} parent=39 // pred_region
        _
      $region52: #{clip_encoder_layer.3} parent=39 // pred_fallthru
        _
    $region40: #{clip_encoder_layer.3} parent=5 // pred_fallthru
      _
    %p442 = scmp.le.s32.totalorder 2, %s14
    // Predicated region
    $region53: #{clip_encoder_layer.3} parent=5 // pred_check
      %p443 = pneg %p442
    $region54: #{clip_encoder_layer.3} parent=5 // pred_check_branch
      %445 = sbr.rel (%p443) target = $region56
    $region55: #{clip_encoder_layer.3} parent=5 // pred_region
      %s446 = ssub.s32 %s14, 2
      // Predicated region
      $region57: #{clip_encoder_layer.3} parent=55 // pred_check
        %p447 = pneg %p153
      $region58: #{clip_encoder_layer.3} parent=55 // pred_check_branch
        %449 = sbr.rel (%p447) target = $region60
      $region59: #{clip_encoder_layer.3} parent=55 // pred_region
        %p450 = scmp.lt.s32.totalorder %s20, 1
        %s451 = scalar_select %p450, %s20, 1
        %s452 = smul.addr %s451, 8
        %s453 = scalar_lea.vmem %s5, %s452
      $region60: #{clip_encoder_layer.3} parent=55 // pred_fallthru
        _
      // Predicated region
      $region61: #{clip_encoder_layer.3} parent=55 // pred_check
        %p454 = pneg %p179
      $region62: #{clip_encoder_layer.3} parent=55 // pred_check_branch
        %456 = sbr.rel (%p454) target = $region64
      $region63: #{clip_encoder_layer.3} parent=55 // pred_region
        %p457 = scmp.lt.s32.totalorder %s20, 1
        %s458 = scalar_select %p457, %s20, 1
        %s459 = smul.addr %s458, 8
        %s460 = scalar_lea.vmem %s6, %s459
      $region64: #{clip_encoder_layer.3} parent=55 // pred_fallthru
        _
      // Predicated region
      $region65: #{clip_encoder_layer.3} parent=55 // pred_check
        %p461 = pneg %p205
      $region66: #{clip_encoder_layer.3} parent=55 // pred_check_branch
        %463 = sbr.rel (%p461) target = $region68
      $region67: #{clip_encoder_layer.3} parent=55 // pred_region
        %p464 = scmp.lt.s32.totalorder %s20, 1
        %s465 = scalar_select %p464, %s20, 1
        %s466 = smul.addr %s465, 8
        %s467 = scalar_lea.vmem %s7, %s466
      $region68: #{clip_encoder_layer.3} parent=55 // pred_fallthru
        _
    $region56: #{clip_encoder_layer.3} parent=5 // pred_fallthru
      _
  $region6: #{clip_encoder_layer.3} parent=0 // loop_footer
    %s18 = sadd.s32 1, %s14
  $region7: #{clip_encoder_layer.3} parent=0 // loop_footer_branch
    %13 = sbr.rel target = $region3
  $region8: #{clip_encoder_layer.3} parent=0 // loop_exit
    _

// kernel: clip_encoder_layer.5
$region0: #{clip_encoder_layer.5}
  #allocation0 [shape = 'u32[]', space=smem, size = 0x4, offset = 0x4, fixed_abs, tag = 'smem constant byte address 0x4 - core index']
  #allocation1 [shape = 'u32[144,128]{1,0:T(1,128)}', space=vmem, size = 0x12000, scoped, tag = 'internal scratch']
  %s0 = inlined_call_operand.vmem [shape: f32[16,32], index: 0, kind: input, shape index: {}]
  %s1 = inlined_call_operand.vmem [shape: f32[16,32], index: 1, kind: input, shape index: {}]
  %s2 = inlined_call_operand.vmem [shape: f32[32,32], index: 2, kind: input, shape index: {}]
  %s3 = inlined_call_operand.vmem [shape: f32[1,32], index: 3, kind: input, shape index: {}]
  %s4 = inlined_call_operand.vmem [shape: f32[1,32], index: 4, kind: input, shape index: {}]
  %s5 = inlined_call_operand.vmem [shape: f32[1,32], index: 5, kind: input, shape index: {}]
  %s6 = inlined_call_operand.vmem [shape: f32[32,128], index: 6, kind: input, shape index: {}]
  %s7 = inlined_call_operand.vmem [shape: f32[1,128], index: 7, kind: input, shape index: {}]
  %s8 = inlined_call_operand.vmem [shape: f32[128,32], index: 8, kind: input, shape index: {}]
  %s9 = inlined_call_operand.vmem [shape: f32[1,32], index: 9, kind: input, shape index: {}]
  %s10 = inlined_call_operand.hbm [shape: f32[16,32], index: 10, kind: output, shape index: {}]
  %s11 = sld [smem:[#allocation0]]
  $region73: #{clip_encoder_layer.5} parent=0
    _
  %s13 = ssub.s32 1, %s11
  %s14 = scalar_select 0, %s13, %s11
  $region1: #{clip_encoder_layer.5} parent=0
    #allocation2 [shape = 'u8[8192]{0}', space=vmem, size = 0x2000, scoped, tag = 'output window, operand 0']
    #allocation3 [shape = 's32[2]{0}', space=sflag, size = 0x8, scoped, tag = 'scoped memory for clip_encoder_layer.5']
    %15 = vsyncpa [#allocation3], 0
    %s16 = scalar_lea.sflag [#allocation3], 1
    %17 = vsyncpa %s16, 0
    loop: start=0, step=1, limit=4
    $region2: #{clip_encoder_layer.5} parent=1 // loop_pre_header
      _
    $region3: #{clip_encoder_layer.5} parent=1 // loop_header
      %s19 = sphi 0, %s23
      %p20 = scmp.ge.s32.totalorder %s19, 4
      %s29 = sphi 0, %s31
      %s32 = sphi 0, %s29
      %s33 = sphi 0, %s32
      %s49 = sphi 0, %s33
      %s55 = sphi 0, %s57
      %s58 = sphi 0, %s55
      %s59 = sphi 0, %s58
      %s75 = sphi 0, %s59
      %s79 = sphi 0, %s79
      %s81 = sphi 0, %s79
      %s82 = sphi 0, %s81
      %s96 = sphi 0, %s82
      %s100 = sphi 0, %s100
      %s102 = sphi 0, %s100
      %s103 = sphi 0, %s102
      %s117 = sphi 0, %s103
      %s121 = sphi 0, %s121
      %s123 = sphi 0, %s121
      %s124 = sphi 0, %s123
      %s138 = sphi 0, %s124
      %s142 = sphi 0, %s142
      %s144 = sphi 0, %s142
      %s145 = sphi 0, %s144
      %s159 = sphi 0, %s145
      %s163 = sphi 0, %s163
      %s165 = sphi 0, %s163
      %s166 = sphi 0, %s165
      %s180 = sphi 0, %s166
      %s184 = sphi 0, %s184
      %s186 = sphi 0, %s184
      %s187 = sphi 0, %s186
      %s201 = sphi 0, %s187
      %s205 = sphi 0, %s205
      %s207 = sphi 0, %s205
      %s208 = sphi 0, %s207
      %s222 = sphi 0, %s208
      %s226 = sphi 0, %s226
      %s228 = sphi 0, %s226
      %s229 = sphi 0, %s228
      %s243 = sphi 0, %s229
      %s249 = sphi 0, %s251
      %s252 = sphi 0, %s249
      %s253 = sphi 0, %s252
      %s269 = sphi 0, %s253
    $region4: #{clip_encoder_layer.5} parent=1 // loop_header_branch
      %22 = sbr.rel (%p20) target = $region8
    $region5: #{clip_encoder_layer.5} parent=1 // loop_body
      %s24 = ssub.s32 %s19, 1
      %s25 = ssub.s32 %s19, 2
      %s26 = sadd.s32 %s19, 1
      %s27 = ssub.s32 %s19, %s26
      %p28 = scmp.eq.s32.totalorder %s27, 0
      %s30 = sadd.s32 %s29, 1
      %s31 = scalar_select %p28, %s29, %s30
      %p34 = pneg %p28
      %p35 = scmp.eq.s32.totalorder %s19, 1
      %p36 = por %p34, %p35
      %p37 = scmp.ne.s32.totalorder %s29, %s32
      %p38 = scmp.eq.s32.totalorder %s19, 0
      %p39 = por %p37, %p38
      %p40 = scmp.ne.s32.totalorder %s29, %s32
      %p41 = scmp.eq.s32.totalorder %s24, 1
      %p42 = por %p40, %p41
      %p43 = scmp.ne.s32.totalorder %s32, %s33
      %p44 = scmp.eq.s32.totalorder %s24, 0
      %p45 = por %p43, %p44
      %p46 = scmp.ne.s32.totalorder %s32, %s33
      %p47 = scmp.eq.s32.totalorder %s25, 1
      %p48 = por %p46, %p47
      %p50 = scmp.ne.s32.totalorder %s33, %s49
      %p51 = scmp.eq.s32.totalorder %s25, 0
      %p52 = por %p50, %p51
      %s53 = ssub.s32 %s19, %s26
      %p54 = scmp.eq.s32.totalorder %s53, 0
      %s56 = sadd.s32 %s55, 1
      %s57 = scalar_select %p54, %s55, %s56
      %p60 = pneg %p54
      %p61 = scmp.eq.s32.totalorder %s19, 1
      %p62 = por %p60, %p61
      %p63 = scmp.ne.s32.totalorder %s55, %s58
      %p64 = scmp.eq.s32.totalorder %s19, 0
      %p65 = por %p63, %p64
      %p66 = scmp.ne.s32.totalorder %s55, %s58
      %p67 = scmp.eq.s32.totalorder %s24, 1
      %p68 = por %p66, %p67
      %p69 = scmp.ne.s32.totalorder %s58, %s59
      %p70 = scmp.eq.s32.totalorder %s24, 0
      %p71 = por %p69, %p70
      %p72 = scmp.ne.s32.totalorder %s58, %s59
      %p73 = scmp.eq.s32.totalorder %s25, 1
      %p74 = por %p72, %p73
      %p76 = scmp.ne.s32.totalorder %s59, %s75
      %p77 = scmp.eq.s32.totalorder %s25, 0
      %p78 = por %p76, %p77
      %s80 = sadd.s32 %s79, 1
      %p83 = scmp.eq.s32.totalorder %s19, 1
      %p84 = scmp.ne.s32.totalorder %s79, %s81
      %p85 = scmp.eq.s32.totalorder %s19, 0
      %p86 = por %p84, %p85
      %p87 = scmp.ne.s32.totalorder %s79, %s81
      %p88 = scmp.eq.s32.totalorder %s24, 1
      %p89 = por %p87, %p88
      %p90 = scmp.ne.s32.totalorder %s81, %s82
      %p91 = scmp.eq.s32.totalorder %s24, 0
      %p92 = por %p90, %p91
      %p93 = scmp.ne.s32.totalorder %s81, %s82
      %p94 = scmp.eq.s32.totalorder %s25, 1
      %p95 = por %p93, %p94
      %p97 = scmp.ne.s32.totalorder %s82, %s96
      %p98 = scmp.eq.s32.totalorder %s25, 0
      %p99 = por %p97, %p98
      %s101 = sadd.s32 %s100, 1
      %p104 = scmp.eq.s32.totalorder %s19, 1
      %p105 = scmp.ne.s32.totalorder %s100, %s102
      %p106 = scmp.eq.s32.totalorder %s19, 0
      %p107 = por %p105, %p106
      %p108 = scmp.ne.s32.totalorder %s100, %s102
      %p109 = scmp.eq.s32.totalorder %s24, 1
      %p110 = por %p108, %p109
      %p111 = scmp.ne.s32.totalorder %s102, %s103
      %p112 = scmp.eq.s32.totalorder %s24, 0
      %p113 = por %p111, %p112
      %p114 = scmp.ne.s32.totalorder %s102, %s103
      %p115 = scmp.eq.s32.totalorder %s25, 1
      %p116 = por %p114, %p115
      %p118 = scmp.ne.s32.totalorder %s103, %s117
      %p119 = scmp.eq.s32.totalorder %s25, 0
      %p120 = por %p118, %p119
      %s122 = sadd.s32 %s121, 1
      %p125 = scmp.eq.s32.totalorder %s19, 1
      %p126 = scmp.ne.s32.totalorder %s121, %s123
      %p127 = scmp.eq.s32.totalorder %s19, 0
      %p128 = por %p126, %p127
      %p129 = scmp.ne.s32.totalorder %s121, %s123
      %p130 = scmp.eq.s32.totalorder %s24, 1
      %p131 = por %p129, %p130
      %p132 = scmp.ne.s32.totalorder %s123, %s124
      %p133 = scmp.eq.s32.totalorder %s24, 0
      %p134 = por %p132, %p133
      %p135 = scmp.ne.s32.totalorder %s123, %s124
      %p136 = scmp.eq.s32.totalorder %s25, 1
      %p137 = por %p135, %p136
      %p139 = scmp.ne.s32.totalorder %s124, %s138
      %p140 = scmp.eq.s32.totalorder %s25, 0
      %p141 = por %p139, %p140
      %s143 = sadd.s32 %s142, 1
      %p146 = scmp.eq.s32.totalorder %s19, 1
      %p147 = scmp.ne.s32.totalorder %s142, %s144
      %p148 = scmp.eq.s32.totalorder %s19, 0
      %p149 = por %p147, %p148
      %p150 = scmp.ne.s32.totalorder %s142, %s144
      %p151 = scmp.eq.s32.totalorder %s24, 1
      %p152 = por %p150, %p151
      %p153 = scmp.ne.s32.totalorder %s144, %s145
      %p154 = scmp.eq.s32.totalorder %s24, 0
      %p155 = por %p153, %p154
      %p156 = scmp.ne.s32.totalorder %s144, %s145
      %p157 = scmp.eq.s32.totalorder %s25, 1
      %p158 = por %p156, %p157
      %p160 = scmp.ne.s32.totalorder %s145, %s159
      %p161 = scmp.eq.s32.totalorder %s25, 0
      %p162 = por %p160, %p161
      %s164 = sadd.s32 %s163, 1
      %p167 = scmp.eq.s32.totalorder %s19, 1
      %p168 = scmp.ne.s32.totalorder %s163, %s165
      %p169 = scmp.eq.s32.totalorder %s19, 0
      %p170 = por %p168, %p169
      %p171 = scmp.ne.s32.totalorder %s163, %s165
      %p172 = scmp.eq.s32.totalorder %s24, 1
      %p173 = por %p171, %p172
      %p174 = scmp.ne.s32.totalorder %s165, %s166
      %p175 = scmp.eq.s32.totalorder %s24, 0
      %p176 = por %p174, %p175
      %p177 = scmp.ne.s32.totalorder %s165, %s166
      %p178 = scmp.eq.s32.totalorder %s25, 1
      %p179 = por %p177, %p178
      %p181 = scmp.ne.s32.totalorder %s166, %s180
      %p182 = scmp.eq.s32.totalorder %s25, 0
      %p183 = por %p181, %p182
      %s185 = sadd.s32 %s184, 1
      %p188 = scmp.eq.s32.totalorder %s19, 1
      %p189 = scmp.ne.s32.totalorder %s184, %s186
      %p190 = scmp.eq.s32.totalorder %s19, 0
      %p191 = por %p189, %p190
      %p192 = scmp.ne.s32.totalorder %s184, %s186
      %p193 = scmp.eq.s32.totalorder %s24, 1
      %p194 = por %p192, %p193
      %p195 = scmp.ne.s32.totalorder %s186, %s187
      %p196 = scmp.eq.s32.totalorder %s24, 0
      %p197 = por %p195, %p196
      %p198 = scmp.ne.s32.totalorder %s186, %s187
      %p199 = scmp.eq.s32.totalorder %s25, 1
      %p200 = por %p198, %p199
      %p202 = scmp.ne.s32.totalorder %s187, %s201
      %p203 = scmp.eq.s32.totalorder %s25, 0
      %p204 = por %p202, %p203
      %s206 = sadd.s32 %s205, 1
      %p209 = scmp.eq.s32.totalorder %s19, 1
      %p210 = scmp.ne.s32.totalorder %s205, %s207
      %p211 = scmp.eq.s32.totalorder %s19, 0
      %p212 = por %p210, %p211
      %p213 = scmp.ne.s32.totalorder %s205, %s207
      %p214 = scmp.eq.s32.totalorder %s24, 1
      %p215 = por %p213, %p214
      %p216 = scmp.ne.s32.totalorder %s207, %s208
      %p217 = scmp.eq.s32.totalorder %s24, 0
      %p218 = por %p216, %p217
      %p219 = scmp.ne.s32.totalorder %s207, %s208
      %p220 = scmp.eq.s32.totalorder %s25, 1
      %p221 = por %p219, %p220
      %p223 = scmp.ne.s32.totalorder %s208, %s222
      %p224 = scmp.eq.s32.totalorder %s25, 0
      %p225 = por %p223, %p224
      %s227 = sadd.s32 %s226, 1
      %p230 = scmp.eq.s32.totalorder %s19, 1
      %p231 = scmp.ne.s32.totalorder %s226, %s228
      %p232 = scmp.eq.s32.totalorder %s19, 0
      %p233 = por %p231, %p232
      %p234 = scmp.ne.s32.totalorder %s226, %s228
      %p235 = scmp.eq.s32.totalorder %s24, 1
      %p236 = por %p234, %p235
      %p237 = scmp.ne.s32.totalorder %s228, %s229
      %p238 = scmp.eq.s32.totalorder %s24, 0
      %p239 = por %p237, %p238
      %p240 = scmp.ne.s32.totalorder %s228, %s229
      %p241 = scmp.eq.s32.totalorder %s25, 1
      %p242 = por %p240, %p241
      %p244 = scmp.ne.s32.totalorder %s229, %s243
      %p245 = scmp.eq.s32.totalorder %s25, 0
      %p246 = por %p244, %p245
      %s247 = ssub.s32 %s19, %s26
      %p248 = scmp.eq.s32.totalorder %s247, 0
      %s250 = sadd.s32 %s249, 1
      %s251 = scalar_select %p248, %s249, %s250
      %p254 = pneg %p248
      %p255 = scmp.eq.s32.totalorder %s19, 1
      %p256 = por %p254, %p255
      %p257 = scmp.ne.s32.totalorder %s249, %s252
      %p258 = scmp.eq.s32.totalorder %s19, 0
      %p259 = por %p257, %p258
      %p260 = scmp.ne.s32.totalorder %s249, %s252
      %p261 = scmp.eq.s32.totalorder %s24, 1
      %p262 = por %p260, %p261
      %p263 = scmp.ne.s32.totalorder %s252, %s253
      %p264 = scmp.eq.s32.totalorder %s24, 0
      %p265 = por %p263, %p264
      %p266 = scmp.ne.s32.totalorder %s252, %s253
      %p267 = scmp.eq.s32.totalorder %s25, 1
      %p268 = por %p266, %p267
      %p270 = scmp.ne.s32.totalorder %s253, %s269
      %p271 = scmp.eq.s32.totalorder %s25, 0
      %p272 = por %p270, %p271
      %p273 = scmp.le.s32.totalorder 1, %s19
      %p274 = scmp.lt.s32.totalorder %s19, 3
      %p275 = pnand %p273, %p274
      %p276 = pneg %p275
      // Predicated region
      $region9: #{clip_encoder_layer.5} parent=5 // pred_check
        _
      $region10: #{clip_encoder_layer.5} parent=5 // pred_check_branch
        %278 = sbr.rel (%p275) target = $region12
      $region11: #{clip_encoder_layer.5} parent=5 // pred_region
        %s279 = ssub.s32 %s19, 1
        // Predicated region
        $region13: #{clip_encoder_layer.5} parent=11 // pred_check
          %p280 = pneg %p92
        $region14: #{clip_encoder_layer.5} parent=11 // pred_check_branch
          %282 = sbr.rel (%p280) target = $region16
        $region15: #{clip_encoder_layer.5} parent=11 // pred_region
          _
        $region16: #{clip_encoder_layer.5} parent=11 // pred_fallthru
          _
        // Predicated region
        $region17: #{clip_encoder_layer.5} parent=11 // pred_check
          %p283 = pneg %p113
        $region18: #{clip_encoder_layer.5} parent=11 // pred_check_branch
          %285 = sbr.rel (%p283) target = $region20
        $region19: #{clip_encoder_layer.5} parent=11 // pred_region
          _
        $region20: #{clip_encoder_layer.5} parent=11 // pred_fallthru
          _
        // Predicated region
        $region21: #{clip_encoder_layer.5} parent=11 // pred_check
          %p286 = pneg %p134
        $region22: #{clip_encoder_layer.5} parent=11 // pred_check_branch
          %288 = sbr.rel (%p286) target = $region24
        $region23: #{clip_encoder_layer.5} parent=11 // pred_region
          _
        $region24: #{clip_encoder_layer.5} parent=11 // pred_fallthru
          _
        // Predicated region
        $region25: #{clip_encoder_layer.5} parent=11 // pred_check
          %p289 = pneg %p155
        $region26: #{clip_encoder_layer.5} parent=11 // pred_check_branch
          %291 = sbr.rel (%p289) target = $region28
        $region27: #{clip_encoder_layer.5} parent=11 // pred_region
          _
        $region28: #{clip_encoder_layer.5} parent=11 // pred_fallthru
          _
        // Predicated region
        $region29: #{clip_encoder_layer.5} parent=11 // pred_check
          %p292 = pneg %p176
        $region30: #{clip_encoder_layer.5} parent=11 // pred_check_branch
          %294 = sbr.rel (%p292) target = $region32
        $region31: #{clip_encoder_layer.5} parent=11 // pred_region
          _
        $region32: #{clip_encoder_layer.5} parent=11 // pred_fallthru
          _
        // Predicated region
        $region33: #{clip_encoder_layer.5} parent=11 // pred_check
          %p295 = pneg %p197
        $region34: #{clip_encoder_layer.5} parent=11 // pred_check_branch
          %297 = sbr.rel (%p295) target = $region36
        $region35: #{clip_encoder_layer.5} parent=11 // pred_region
          _
        $region36: #{clip_encoder_layer.5} parent=11 // pred_fallthru
          _
        // Predicated region
        $region37: #{clip_encoder_layer.5} parent=11 // pred_check
          %p298 = pneg %p218
        $region38: #{clip_encoder_layer.5} parent=11 // pred_check_branch
          %300 = sbr.rel (%p298) target = $region40
        $region39: #{clip_encoder_layer.5} parent=11 // pred_region
          _
        $region40: #{clip_encoder_layer.5} parent=11 // pred_fallthru
          _
        // Predicated region
        $region41: #{clip_encoder_layer.5} parent=11 // pred_check
          %p301 = pneg %p239
        $region42: #{clip_encoder_layer.5} parent=11 // pred_check_branch
          %303 = sbr.rel (%p301) target = $region44
        $region43: #{clip_encoder_layer.5} parent=11 // pred_region
          _
        $region44: #{clip_encoder_layer.5} parent=11 // pred_fallthru
          _
      $region12: #{clip_encoder_layer.5} parent=5 // pred_fallthru
        _
      %p304 = scmp.lt.s32.totalorder %s19, 2
      // Predicated region
      $region45: #{clip_encoder_layer.5} parent=5 // pred_check
        %p305 = pneg %p304
      $region46: #{clip_encoder_layer.5} parent=5 // pred_check_branch
        %307 = sbr.rel (%p305) target = $region48
      $region47: #{clip_encoder_layer.5} parent=5 // pred_region
        // Predicated region
        $region49: #{clip_encoder_layer.5} parent=47 // pred_check
          %p308 = pneg %p39
        $region50: #{clip_encoder_layer.5} parent=47 // pred_check_branch
          %310 = sbr.rel (%p308) target = $region52
        $region51: #{clip_encoder_layer.5} parent=47 // pred_region
          %p311 = scmp.lt.s32.totalorder %s19, 1
          %s312 = scalar_select %p311, %s19, 1
          %s313 = smul.addr %s312, 8
          %s314 = scalar_lea.vmem %s0, %s313
        $region52: #{clip_encoder_layer.5} parent=47 // pred_fallthru
          _
        // Predicated region
        $region53: #{clip_encoder_layer.5} parent=47 // pred_check
          %p315 = pneg %p65
        $region54: #{clip_encoder_layer.5} parent=47 // pred_check_branch
          %317 = sbr.rel (%p315) target = $region56
        $region55: #{clip_encoder_layer.5} parent=47 // pred_region
          %p318 = scmp.lt.s32.totalorder %s19, 1
          %s319 = scalar_select %p318, %s19, 1
          %s320 = smul.addr %s319, 8
          %s321 = scalar_lea.vmem %s1, %s320
        $region56: #{clip_encoder_layer.5} parent=47 // pred_fallthru
          _
      $region48: #{clip_encoder_layer.5} parent=5 // pred_fallthru
        _
      %p322 = scmp.le.s32.totalorder 1, %s19
      %p323 = scmp.lt.s32.totalorder %s19, 3
      %p324 = pnand %p322, %p323
      %p325 = pneg %p324
      // Predicated region
      $region57: #{clip_encoder_layer.5} parent=5 // pred_check
        _
      $region58: #{clip_encoder_layer.5} parent=5 // pred_check_branch
        %327 = sbr.rel (%p324) target = $region60
      $region59: #{clip_encoder_layer.5} parent=5 // pred_region
        %s328 = ssub.s32 %s19, 1
        %p329 = scmp.lt.s32.totalorder %s24, 1
        %s330 = scalar_select %p329, %s24, 1
        %s331 = smul.addr %s330, 8
        %s332 = scalar_lea.vmem %s0, %s331
        %p333 = pneg %p45
        %p334 = pneg %p42
        %p335 = scmp.lt.s32.totalorder %s24, 1
        %s336 = scalar_select %p335, %s24, 1
        %s337 = smul.addr %s336, 8
        %s338 = scalar_lea.vmem %s1, %s337
        %p339 = pneg %p71
        %p340 = pneg %p68
        %p341 = pneg %p92
        %p342 = pneg %p89
        %p343 = pneg %p113
        %p344 = pneg %p110
        %p345 = pneg %p134
        %p346 = pneg %p131
        %p347 = pneg %p155
        %p348 = pneg %p152
        %p349 = pneg %p176
        %p350 = pneg %p173
        %p351 = pneg %p197
        %p352 = pneg %p194
        %p353 = pneg %p218
        %p354 = pneg %p215
        %p355 = pneg %p239
        %p356 = pneg %p236
        %p357 = pneg %p265
        %p358 = pneg %p262
        %s359 = sand.u32 %s252, 1
        %s360 = scalar_lea.sflag [#allocation3], %s359
        %s361 = sand.u32 %s252, 1
        %s362 = smul.addr %s361, 8
        %s363 = scalar_lea.vmem [#allocation2], %s362
        %p364 = scmp.lt.s32.totalorder %s24, 1
        %s365 = scalar_select %p364, %s24, 1
        %s366 = smul.addr %s365, 8
        %s367 = scalar_lea.vmem %s0, %s366
        %p368 = scmp.lt.s32.totalorder %s24, 1
        %s369 = scalar_select %p368, %s24, 1
        %s370 = smul.addr %s369, 8
        %s371 = scalar_lea.vmem %s1, %s370
        %v372 = vld [vmem:[%s367] sm:$0xff]
        %v373 = vld [vmem:[%s2] sm:$0xff]
        %v374 = vld [vmem:[%s2 + $0x8] sm:$0xff]
        %v375 = vld [vmem:[%s2 + $0x10] sm:$0xff]
        %v376 = vld [vmem:[%s2 + $0x18] sm:$0xff]
        %v377 = vld [vmem:[%s3] sm:$0x1]
        %v379 = vlaneseq
        %v380 = vshrl.u32 %v379, 7
        %v381 = vsub.s32 0, %v380
        %v382 = vrot.slane %v377, %v381
        %vm384 = vcmask 261120
        %v386 = vsel %vm384, %v372, 0
        %388 = vmatprep.subr.mxu0 0.0
        %389 = vmatpush1.msra.mxu0 %v373
        %390 = vmatprep.subr.mxu0 0.0
        %391 = vmatpush1.msra.mxu0 %v374
        %392 = vmatprep.subr.mxu0 0.0
        %393 = vmatpush1.msra.mxu0 %v375
        %394 = vmatprep.subr.mxu0 0.0
        %395 = vmatpush1.msra.mxu0 %v376
        %396 = vmatprep.subr.mxu0 0.0
        %397 = vmatpush1.msra.mxu0 0.0
        %398 = vmatprep.subr.mxu0 0.0
        %399 = vmatpush1.msra.mxu0 0.0
        %400 = vmatprep.subr.mxu0 0.0
        %401 = vmatpush1.msra.mxu0 0.0
        %402 = vmatprep.subr.mxu0 0.0
        %403 = vmatpush1.msra.mxu0 0.0
        %404 = vmatprep.subr.mxu0 0.0
        %405 = vmatpush1.msra.mxu0 0.0
        %406 = vmatprep.subr.mxu0 0.0
        %407 = vmatpush1.msra.mxu0 0.0
        %408 = vmatprep.subr.mxu0 0.0
        %409 = vmatpush1.msra.mxu0 0.0
        %410 = vmatprep.subr.mxu0 0.0
        %411 = vmatpush1.msra.mxu0 0.0
        %412 = vmatprep.subr.mxu0 0.0
        %413 = vmatpush1.msra.mxu0 0.0
        %414 = vmatprep.subr.mxu0 0.0
        %415 = vmatpush1.msra.mxu0 0.0
        %416 = vmatprep.subr.mxu0 0.0
        %417 = vmatpush1.msra.mxu0 0.0
        %418 = vmatprep.subr.mxu0 0.0
        %419 = vmatpush1.msra.mxu0 0.0
        %420 = vmatprep.subr.mxu0 0.0
        %421 = vmatpush1.msra.mxu0 0.0
        %422 = vmatprep.subr.mxu0 0.0
        %423 = vmatpush1.msra.mxu0 0.0
        %424 = vmatprep.subr.mxu0 0.0
        %425 = vmatpush1.msra.mxu0 0.0
        %426 = vmatprep.subr.mxu0 0.0
        %427 = vmatpush1.msra.mxu0 0.0
        %428 = vmatprep.subr.mxu0 0.0
        %429 = vmatpush1.msra.mxu0 0.0
        %430 = vmatprep.subr.mxu0 0.0
        %431 = vmatpush1.msra.mxu0 0.0
        %432 = vmatprep.subr.mxu0 0.0
        %433 = vmatpush1.msra.mxu0 0.0
        %434 = vmatprep.subr.mxu0 0.0
        %435 = vmatpush1.msra.mxu0 0.0
        %436 = vmatprep.subr.mxu0 0.0
        %437 = vmatpush1.msra.mxu0 0.0
        %438 = vmatprep.subr.mxu0 0.0
        %439 = vmatpush1.msra.mxu0 0.0
        %440 = vmatprep.subr.mxu0 0.0
        %441 = vmatpush1.msra.mxu0 0.0
        %442 = vmatprep.subr.mxu0 0.0
        %443 = vmatpush1.msra.mxu0 0.0
        %444 = vmatprep.subr.mxu0 0.0
        %445 = vmatpush1.msra.mxu0 0.0
        %446 = vmatprep.subr.mxu0 0.0
        %447 = vmatpush1.msra.mxu0 0.0
        %448 = vmatprep.subr.mxu0 0.0
        %449 = vmatpush1.msra.mxu0 0.0
        %450 = vmatprep.subr.mxu0 0.0
        %451 = vmatpush1.msra.mxu0 0.0
        %452 = vmatprep.mubr.f32.mxu0 0.0
        %453 = vmatmul.mubr.f32.gmra.mrb[0].mxu0 %v386
        %v454 = vpop.f32.mrb[0].mxu0
        %v455 = vadd.f32 %v382, %v454
        %v456 = vpop.f32.mrb[0].mxu0
        %457 = vdwg.mxu0
        %v458 = vld [vmem:[%s371] sm:$0xff]
        %v459 = vadd.f32 %v455, %v458
        %v460 = vsel %vm384, %v459, 0.0
        %461 = vadd.xlane.f32.xlu0 %v460
        %v462 = vpop.xlane.xlu0 %461
        %v463 = vrcp.pop 32.0
        %v464 = vmul.f32 %v462, %v463
        %v465 = vsub.f32 %v459, %v464
        %v466 = vmul.f32 %v465, %v465
        %v467 = vsel %vm384, %v466, 0.0
        %468 = vadd.xlane.f32.xlu0 %v467
        %v469 = vpop.xlane.xlu0 %468
        %v470 = vmul.f32 %v469, %v463
        %v471 = vadd.f32 %v470, 1e-05
        %v472 = vrsqrt.pop %v471
        %v473 = vmul.f32 %v465, %v472
        %v474 = vld [vmem:[%s4] sm:$0x1]
        %v476 = vlaneseq
        %v477 = vshrl.u32 %v476, 7
        %v478 = vsub.s32 0, %v477
        %v479 = vrot.slane %v474, %v478
        %v481 = vmul.f32 %v473, %v479
        %v482 = vld [vmem:[%s5] sm:$0x1]
        %v484 = vlaneseq
        %v485 = vshrl.u32 %v484, 7
        %v486 = vsub.s32 0, %v485
        %v487 = vrot.slane %v482, %v486
        %v489 = vadd.f32 %v481, %v487
        %v490 = vld [vmem:[%s6] sm:$0xff]
        %v491 = vld [vmem:[%s6 + $0x8] sm:$0xff]
        %v492 = vld [vmem:[%s6 + $0x10] sm:$0xff]
        %v493 = vld [vmem:[%s6 + $0x18] sm:$0xff]
        %v494 = vld [vmem:[%s7] sm:$0x1]
        %v496 = vlaneseq
        %v497 = vshrl.u32 %v496, 7
        %v498 = vsub.s32 0, %v497
        %v499 = vrot.slane %v494, %v498
        %v502 = vsel %vm384, %v489, 0
        %504 = vmatprep.subr.mxu0 0.0
        %505 = vmatpush1.msra.mxu0 %v490
        %506 = vmatprep.subr.mxu0 0.0
        %507 = vmatpush1.msra.mxu0 %v491
        %508 = vmatprep.subr.mxu0 0.0
        %509 = vmatpush1.msra.mxu0 %v492
        %510 = vmatprep.subr.mxu0 0.0
        %511 = vmatpush1.msra.mxu0 %v493
        %512 = vmatprep.subr.mxu0 0.0
        %513 = vmatpush1.msra.mxu0 0.0
        %514 = vmatprep.subr.mxu0 0.0
        %515 = vmatpush1.msra.mxu0 0.0
        %516 = vmatprep.subr.mxu0 0.0
        %517 = vmatpush1.msra.mxu0 0.0
        %518 = vmatprep.subr.mxu0 0.0
        %519 = vmatpush1.msra.mxu0 0.0
        %520 = vmatprep.subr.mxu0 0.0
        %521 = vmatpush1.msra.mxu0 0.0
        %522 = vmatprep.subr.mxu0 0.0
        %523 = vmatpush1.msra.mxu0 0.0
        %524 = vmatprep.subr.mxu0 0.0
        %525 = vmatpush1.msra.mxu0 0.0
        %526 = vmatprep.subr.mxu0 0.0
        %527 = vmatpush1.msra.mxu0 0.0
        %528 = vmatprep.subr.mxu0 0.0
        %529 = vmatpush1.msra.mxu0 0.0
        %530 = vmatprep.subr.mxu0 0.0
        %531 = vmatpush1.msra.mxu0 0.0
        %532 = vmatprep.subr.mxu0 0.0
        %533 = vmatpush1.msra.mxu0 0.0
        %534 = vmatprep.subr.mxu0 0.0
        %535 = vmatpush1.msra.mxu0 0.0
        %536 = vmatprep.subr.mxu0 0.0
        %537 = vmatpush1.msra.mxu0 0.0
        %538 = vmatprep.subr.mxu0 0.0
        %539 = vmatpush1.msra.mxu0 0.0
        %540 = vmatprep.subr.mxu0 0.0
        %541 = vmatpush1.msra.mxu0 0.0
        %542 = vmatprep.subr.mxu0 0.0
        %543 = vmatpush1.msra.mxu0 0.0
        %544 = vmatprep.subr.mxu0 0.0
        %545 = vmatpush1.msra.mxu0 0.0
        %546 = vmatprep.subr.mxu0 0.0
        %547 = vmatpush1.msra.mxu0 0.0
        %548 = vmatprep.subr.mxu0 0.0
        %549 = vmatpush1.msra.mxu0 0.0
        %550 = vmatprep.subr.mxu0 0.0
        %551 = vmatpush1.msra.mxu0 0.0
        %552 = vmatprep.subr.mxu0 0.0
        %553 = vmatpush1.msra.mxu0 0.0
        %554 = vmatprep.subr.mxu0 0.0
        %555 = vmatpush1.msra.mxu0 0.0
        %556 = vmatprep.subr.mxu0 0.0
        %557 = vmatpush1.msra.mxu0 0.0
        %558 = vmatprep.subr.mxu0 0.0
        %559 = vmatpush1.msra.mxu0 0.0
        %560 = vmatprep.subr.mxu0 0.0
        %561 = vmatpush1.msra.mxu0 0.0
        %562 = vmatprep.subr.mxu0 0.0
        %563 = vmatpush1.msra.mxu0 0.0
        %564 = vmatprep.subr.mxu0 0.0
        %565 = vmatpush1.msra.mxu0 0.0
        %566 = vmatprep.subr.mxu0 0.0
        %567 = vmatpush1.msra.mxu0 0.0
        %568 = vmatprep.mubr.f32.mxu0 0.0
        %569 = vmatmul.mubr.f32.gmra.mrb[0].mxu0 %v502
        %v570 = vpop.f32.mrb[0].mxu0
        %v571 = vadd.f32 %v499, %v570
        %v572 = vpop.f32.mrb[0].mxu0
        %573 = vdwg.mxu0
        %v574 = vmul.f32 %v571, 1.702
        %v575 = vxor.u32 %v574, 2147483648
        %v576 = vmul.f32 %v575, 1.442695
        %v577 = vpow.pop %v576
        %v578 = vadd.f32 %v577, 1.0
        %v579 = vrcp.pop %v578
        %v580 = vmul.f32 1.0, %v579
        %v581 = vmul.f32 %v571, %v580
        %v582 = vld [vmem:[%s8] sm:$0xff]
        %v583 = vld [vmem:[%s8 + $0x8] sm:$0xff]
        %v584 = vld [vmem:[%s8 + $0x10] sm:$0xff]
        %v585 = vld [vmem:[%s8 + $0x18] sm:$0xff]
        %v586 = vld [vmem:[%s8 + $0x20] sm:$0xff]
        %v587 = vld [vmem:[%s8 + $0x28] sm:$0xff]
        %v588 = vld [vmem:[%s8 + $0x30] sm:$0xff]
        %v589 = vld [vmem:[%s8 + $0x38] sm:$0xff]
        %v590 = vld [vmem:[%s8 + $0x40] sm:$0xff]
        %v591 = vld [vmem:[%s8 + $0x48] sm:$0xff]
        %v592 = vld [vmem:[%s8 + $0x50] sm:$0xff]
        %v593 = vld [vmem:[%s8 + $0x58] sm:$0xff]
        %v594 = vld [vmem:[%s8 + $0x60] sm:$0xff]
        %v595 = vld [vmem:[%s8 + $0x68] sm:$0xff]
        %v596 = vld [vmem:[%s8 + $0x70] sm:$0xff]
        %v597 = vld [vmem:[%s8 + $0x78] sm:$0xff]
        %v598 = vld [vmem:[%s9] sm:$0x1]
        %v600 = vlaneseq
        %v601 = vshrl.u32 %v600, 7
        %v602 = vsub.s32 0, %v601
        %v603 = vrot.slane %v598, %v602
        %605 = vmatprep.subr.mxu0 0.0
        %606 = vmatpush1.msra.mxu0 %v582
        %607 = vmatprep.subr.mxu0 0.0
        %608 = vmatpush1.msra.mxu0 %v583
        %609 = vmatprep.subr.mxu0 0.0
        %610 = vmatpush1.msra.mxu0 %v584
        %611 = vmatprep.subr.mxu0 0.0
        %612 = vmatpush1.msra.mxu0 %v585
        %613 = vmatprep.subr.mxu0 0.0
        %614 = vmatpush1.msra.mxu0 %v586
        %615 = vmatprep.subr.mxu0 0.0
        %616 = vmatpush1.msra.mxu0 %v587
        %617 = vmatprep.subr.mxu0 0.0
        %618 = vmatpush1.msra.mxu0 %v588
        %619 = vmatprep.subr.mxu0 0.0
        %620 = vmatpush1.msra.mxu0 %v589
        %621 = vmatprep.subr.mxu0 0.0
        %622 = vmatpush1.msra.mxu0 %v590
        %623 = vmatprep.subr.mxu0 0.0
        %624 = vmatpush1.msra.mxu0 %v591
        %625 = vmatprep.subr.mxu0 0.0
        %626 = vmatpush1.msra.mxu0 %v592
        %627 = vmatprep.subr.mxu0 0.0
        %628 = vmatpush1.msra.mxu0 %v593
        %629 = vmatprep.subr.mxu0 0.0
        %630 = vmatpush1.msra.mxu0 %v594
        %631 = vmatprep.subr.mxu0 0.0
        %632 = vmatpush1.msra.mxu0 %v595
        %633 = vmatprep.subr.mxu0 0.0
        %634 = vmatpush1.msra.mxu0 %v596
        %635 = vmatprep.subr.mxu0 0.0
        %636 = vmatpush1.msra.mxu0 %v597
        %637 = vmatprep.subr.mxu0 0.0
        %638 = vmatpush1.msra.mxu0 0.0
        %639 = vmatprep.subr.mxu0 0.0
        %640 = vmatpush1.msra.mxu0 0.0
        %641 = vmatprep.subr.mxu0 0.0
        %642 = vmatpush1.msra.mxu0 0.0
        %643 = vmatprep.subr.mxu0 0.0
        %644 = vmatpush1.msra.mxu0 0.0
        %645 = vmatprep.subr.mxu0 0.0
        %646 = vmatpush1.msra.mxu0 0.0
        %647 = vmatprep.subr.mxu0 0.0
        %648 = vmatpush1.msra.mxu0 0.0
        %649 = vmatprep.subr.mxu0 0.0
        %650 = vmatpush1.msra.mxu0 0.0
        %651 = vmatprep.subr.mxu0 0.0
        %652 = vmatpush1.msra.mxu0 0.0
        %653 = vmatprep.subr.mxu0 0.0
        %654 = vmatpush1.msra.mxu0 0.0
        %655 = vmatprep.subr.mxu0 0.0
        %656 = vmatpush1.msra.mxu0 0.0
        %657 = vmatprep.subr.mxu0 0.0
        %658 = vmatpush1.msra.mxu0 0.0
        %659 = vmatprep.subr.mxu0 0.0
        %660 = vmatpush1.msra.mxu0 0.0
        %661 = vmatprep.subr.mxu0 0.0
        %662 = vmatpush1.msra.mxu0 0.0
        %663 = vmatprep.subr.mxu0 0.0
        %664 = vmatpush1.msra.mxu0 0.0
        %665 = vmatprep.subr.mxu0 0.0
        %666 = vmatpush1.msra.mxu0 0.0
        %667 = vmatprep.subr.mxu0 0.0
        %668 = vmatpush1.msra.mxu0 0.0
        %669 = vmatprep.mubr.f32.mxu0 0.0
        %670 = vmatmul.mubr.f32.gmra.mrb[0].mxu0 %v581
        %v671 = vpop.f32.mrb[0].mxu0
        %v672 = vadd.f32 %v603, %v671
        %v673 = vpop.f32.mrb[0].mxu0
        %674 = vdwg.mxu0
        %v675 = vadd.f32 %v672, %v459
        %676 = vst.msk [vmem:[%s363] sm:$0xff] %vm384, %v675
        %s677 = sand.u32 %s252, 1
        %s678 = scalar_lea.sflag [#allocation3], %s677
        %s679 = sand.u32 %s252, 1
        %s680 = smul.addr %s679, 8
        %s681 = scalar_lea.vmem [#allocation2], %s680
        // Predicated region
        $region61: #{clip_encoder_layer.5} parent=59 // pred_check
          %p682 = pneg %p262
        $region62: #{clip_encoder_layer.5} parent=59 // pred_check_branch
          %684 = sbr.rel (%p682) target = $region64
        $region63: #{clip_encoder_layer.5} parent=59 // pred_region
          %s686 = ssub.s32 128, 128
          %687 = vsyncadd %s678, %s686
          %s688 = smul.addr %s24, 128
          %s689 = scalar_lea.hbm %s10, %s688
          %s691 = sshll.u32 %s681, 4
          %s692 = int_to_ptr.vmem [resolvable:$true] %s691
          %694 = dma.vmem_to_hbm [thread:$0]  %s692, 128, %s689, %s678
        $region64: #{clip_encoder_layer.5} parent=59 // pred_fallthru
          _
      $region60: #{clip_encoder_layer.5} parent=5 // pred_fallthru
        _
      %p695 = scmp.le.s32.totalorder 2, %s19
      // Predicated region
      $region65: #{clip_encoder_layer.5} parent=5 // pred_check
        %p696 = pneg %p695
      $region66: #{clip_encoder_layer.5} parent=5 // pred_check_branch
        %698 = sbr.rel (%p696) target = $region68
      $region67: #{clip_encoder_layer.5} parent=5 // pred_region
        %s699 = ssub.s32 %s19, 2
        // Predicated region
        $region69: #{clip_encoder_layer.5} parent=67 // pred_check
          %p700 = pneg %p268
        $region70: #{clip_encoder_layer.5} parent=67 // pred_check_branch
          %702 = sbr.rel (%p700) target = $region72
        $region71: #{clip_encoder_layer.5} parent=67 // pred_region
          %s703 = sand.u32 %s253, 1
          %s704 = scalar_lea.sflag [#allocation3], %s703
          %s705 = sand.u32 %s253, 1
          %s706 = smul.addr %s705, 8
          %s707 = scalar_lea.vmem [#allocation2], %s706
          %708 = dma.done %s704, 128
        $region72: #{clip_encoder_layer.5} parent=67 // pred_fallthru
          _
      $region68: #{clip_encoder_layer.5} parent=5 // pred_fallthru
        _
    $region6: #{clip_encoder_layer.5} parent=1 // loop_footer
      %s23 = sadd.s32 1, %s19
    $region7: #{clip_encoder_layer.5} parent=1 // loop_footer_branch
      %18 = sbr.rel target = $region3
    $region8: #{clip_encoder_layer.5} parent=1 // loop_exit
      _
    %709 = vsyncpa [#allocation3], 1
    %s710 = scalar_lea.sflag [#allocation3], 1
    %711 = vsyncpa %s710, 1

// kernel: clip_encoder_layer.4
$region0: #{clip_encoder_layer.4}
  #allocation0 [shape = 'u32[]', space=smem, size = 0x4, offset = 0x4, fixed_abs, tag = 'smem constant byte address 0x4 - core index']
  #allocation1 [shape = 'u32[144,128]{1,0:T(1,128)}', space=vmem, size = 0x12000, scoped, tag = 'internal scratch']
  %s0 = inlined_call_operand.vmem [shape: f32[2,8,32], index: 0, kind: input, shape index: {}]
  %s1 = inlined_call_operand.vmem [shape: f32[2,8,32], index: 1, kind: input, shape index: {}]
  %s2 = inlined_call_operand.vmem [shape: f32[2,8,32], index: 2, kind: input, shape index: {}]
  %s3 = inlined_call_operand.vmem [shape: f32[2,1,8,8], index: 3, kind: input, shape index: {}]
  %s4 = inlined_call_operand.vmem [shape: f32[2,8,32], index: 4, kind: output, shape index: {}]
  %s5 = sld [smem:[#allocation0]]
  $region49: #{clip_encoder_layer.4} parent=0
    _
  %s7 = ssub.s32 1, %s5
  %s8 = scalar_select 0, %s7, %s5
  loop: start=0, step=1, limit=4
  $region2: #{clip_encoder_layer.4} parent=0 // loop_pre_header
    _
  $region3: #{clip_encoder_layer.4} parent=0 // loop_header
    %s10 = sphi 0, %s14
    %p11 = scmp.ge.s32.totalorder %s10, 4
    %s17 = sphi 0, %s29
    %s18 = sphi 0, %s25
    %s19 = sphi 0, %s17
    %s20 = sphi 0, %s18
    %s21 = sphi 0, %s19
    %s22 = sphi 0, %s20
    %s34 = sphi 0, %s36
    %s37 = sphi 0, %s34
    %s38 = sphi 0, %s37
    %s54 = sphi 0, %s38
    %s62 = sphi 0, %s64
    %s65 = sphi 0, %s62
    %s66 = sphi 0, %s65
    %s82 = sphi 0, %s66
    %s90 = sphi 0, %s92
    %s93 = sphi 0, %s90
    %s94 = sphi 0, %s93
    %s110 = sphi 0, %s94
    %s116 = sphi 0, %s118
    %s119 = sphi 0, %s116
    %s120 = sphi 0, %s119
    %s136 = sphi 0, %s120
    %s144 = sphi 0, %s146
    %s147 = sphi 0, %s144
    %s148 = sphi 0, %s147
    %s164 = sphi 0, %s148
  $region4: #{clip_encoder_layer.4} parent=0 // loop_header_branch
    %13 = sbr.rel (%p11) target = $region8
  $region5: #{clip_encoder_layer.4} parent=0 // loop_body
    %s15 = ssub.s32 %s10, 1
    %s16 = ssub.s32 %s10, 2
    %s23 = sadd.s32 1, %s18
    %p24 = scmp.ge.s32.totalorder %s23, 1
    %s25 = scalar_select %p24, 0, %s23
    %s26 = sadd.s32 1, %s17
    %s27 = scalar_select %p24, %s26, %s17
    %p28 = scmp.ge.s32.totalorder %s27, 2
    %s29 = scalar_select %p28, 0, %s27
    %s30 = ssub.s32 %s17, %s29
    %s31 = ssub.s32 %s18, %s25
    %s32 = sor.u32 %s30, %s31
    %p33 = scmp.eq.s32.totalorder %s32, 0
    %s35 = sadd.s32 %s34, 1
    %s36 = scalar_select %p33, %s34, %s35
    %p39 = pneg %p33
    %p40 = scmp.eq.s32.totalorder %s10, 1
    %p41 = por %p39, %p40
    %p42 = scmp.ne.s32.totalorder %s34, %s37
    %p43 = scmp.eq.s32.totalorder %s10, 0
    %p44 = por %p42, %p43
    %p45 = scmp.ne.s32.totalorder %s34, %s37
    %p46 = scmp.eq.s32.totalorder %s15, 1
    %p47 = por %p45, %p46
    %p48 = scmp.ne.s32.totalorder %s37, %s38
    %p49 = scmp.eq.s32.totalorder %s15, 0
    %p50 = por %p48, %p49
    %p51 = scmp.ne.s32.totalorder %s37, %s38
    %p52 = scmp.eq.s32.totalorder %s16, 1
    %p53 = por %p51, %p52
    %p55 = scmp.ne.s32.totalorder %s38, %s54
    %p56 = scmp.eq.s32.totalorder %s16, 0
    %p57 = por %p55, %p56
    %s58 = ssub.s32 %s17, %s29
    %s59 = ssub.s32 %s18, %s25
    %s60 = sor.u32 %s58, %s59
    %p61 = scmp.eq.s32.totalorder %s60, 0
    %s63 = sadd.s32 %s62, 1
    %s64 = scalar_select %p61, %s62, %s63
    %p67 = pneg %p61
    %p68 = scmp.eq.s32.totalorder %s10, 1
    %p69 = por %p67, %p68
    %p70 = scmp.ne.s32.totalorder %s62, %s65
    %p71 = scmp.eq.s32.totalorder %s10, 0
    %p72 = por %p70, %p71
    %p73 = scmp.ne.s32.totalorder %s62, %s65
    %p74 = scmp.eq.s32.totalorder %s15, 1
    %p75 = por %p73, %p74
    %p76 = scmp.ne.s32.totalorder %s65, %s66
    %p77 = scmp.eq.s32.totalorder %s15, 0
    %p78 = por %p76, %p77
    %p79 = scmp.ne.s32.totalorder %s65, %s66
    %p80 = scmp.eq.s32.totalorder %s16, 1
    %p81 = por %p79, %p80
    %p83 = scmp.ne.s32.totalorder %s66, %s82
    %p84 = scmp.eq.s32.totalorder %s16, 0
    %p85 = por %p83, %p84
    %s86 = ssub.s32 %s17, %s29
    %s87 = ssub.s32 %s18, %s25
    %s88 = sor.u32 %s86, %s87
    %p89 = scmp.eq.s32.totalorder %s88, 0
    %s91 = sadd.s32 %s90, 1
    %s92 = scalar_select %p89, %s90, %s91
    %p95 = pneg %p89
    %p96 = scmp.eq.s32.totalorder %s10, 1
    %p97 = por %p95, %p96
    %p98 = scmp.ne.s32.totalorder %s90, %s93
    %p99 = scmp.eq.s32.totalorder %s10, 0
    %p100 = por %p98, %p99
    %p101 = scmp.ne.s32.totalorder %s90, %s93
    %p102 = scmp.eq.s32.totalorder %s15, 1
    %p103 = por %p101, %p102
    %p104 = scmp.ne.s32.totalorder %s93, %s94
    %p105 = scmp.eq.s32.totalorder %s15, 0
    %p106 = por %p104, %p105
    %p107 = scmp.ne.s32.totalorder %s93, %s94
    %p108 = scmp.eq.s32.totalorder %s16, 1
    %p109 = por %p107, %p108
    %p111 = scmp.ne.s32.totalorder %s94, %s110
    %p112 = scmp.eq.s32.totalorder %s16, 0
    %p113 = por %p111, %p112
    %s114 = ssub.s32 %s17, %s29
    %p115 = scmp.eq.s32.totalorder %s114, 0
    %s117 = sadd.s32 %s116, 1
    %s118 = scalar_select %p115, %s116, %s117
    %p121 = pneg %p115
    %p122 = scmp.eq.s32.totalorder %s10, 1
    %p123 = por %p121, %p122
    %p124 = scmp.ne.s32.totalorder %s116, %s119
    %p125 = scmp.eq.s32.totalorder %s10, 0
    %p126 = por %p124, %p125
    %p127 = scmp.ne.s32.totalorder %s116, %s119
    %p128 = scmp.eq.s32.totalorder %s15, 1
    %p129 = por %p127, %p128
    %p130 = scmp.ne.s32.totalorder %s119, %s120
    %p131 = scmp.eq.s32.totalorder %s15, 0
    %p132 = por %p130, %p131
    %p133 = scmp.ne.s32.totalorder %s119, %s120
    %p134 = scmp.eq.s32.totalorder %s16, 1
    %p135 = por %p133, %p134
    %p137 = scmp.ne.s32.totalorder %s120, %s136
    %p138 = scmp.eq.s32.totalorder %s16, 0
    %p139 = por %p137, %p138
    %s140 = ssub.s32 %s17, %s29
    %s141 = ssub.s32 %s18, %s25
    %s142 = sor.u32 %s140, %s141
    %p143 = scmp.eq.s32.totalorder %s142, 0
    %s145 = sadd.s32 %s144, 1
    %s146 = scalar_select %p143, %s144, %s145
    %p149 = pneg %p143
    %p150 = scmp.eq.s32.totalorder %s10, 1
    %p151 = por %p149, %p150
    %p152 = scmp.ne.s32.totalorder %s144, %s147
    %p153 = scmp.eq.s32.totalorder %s10, 0
    %p154 = por %p152, %p153
    %p155 = scmp.ne.s32.totalorder %s144, %s147
    %p156 = scmp.eq.s32.totalorder %s15, 1
    %p157 = por %p155, %p156
    %p158 = scmp.ne.s32.totalorder %s147, %s148
    %p159 = scmp.eq.s32.totalorder %s15, 0
    %p160 = por %p158, %p159
    %p161 = scmp.ne.s32.totalorder %s147, %s148
    %p162 = scmp.eq.s32.totalorder %s16, 1
    %p163 = por %p161, %p162
    %p165 = scmp.ne.s32.totalorder %s148, %s164
    %p166 = scmp.eq.s32.totalorder %s16, 0
    %p167 = por %p165, %p166
    %p168 = scmp.le.s32.totalorder 1, %s10
    %p169 = scmp.lt.s32.totalorder %s10, 3
    %p170 = pnand %p168, %p169
    %p171 = pneg %p170
    // Predicated region
    $region9: #{clip_encoder_layer.4} parent=5 // pred_check
      _
    $region10: #{clip_encoder_layer.4} parent=5 // pred_check_branch
      %173 = sbr.rel (%p170) target = $region12
    $region11: #{clip_encoder_layer.4} parent=5 // pred_region
      %s174 = ssub.s32 %s10, 1
    $region12: #{clip_encoder_layer.4} parent=5 // pred_fallthru
      _
    %p175 = scmp.lt.s32.totalorder %s10, 2
    // Predicated region
    $region13: #{clip_encoder_layer.4} parent=5 // pred_check
      %p176 = pneg %p175
    $region14: #{clip_encoder_layer.4} parent=5 // pred_check_branch
      %178 = sbr.rel (%p176) target = $region16
    $region15: #{clip_encoder_layer.4} parent=5 // pred_region
      // Predicated region
      $region17: #{clip_encoder_layer.4} parent=15 // pred_check
        %p179 = pneg %p44
      $region18: #{clip_encoder_layer.4} parent=15 // pred_check_branch
        %181 = sbr.rel (%p179) target = $region20
      $region19: #{clip_encoder_layer.4} parent=15 // pred_region
        %p182 = scmp.lt.s32.totalorder %s17, 1
        %s183 = scalar_select %p182, %s17, 1
        %p184 = scmp.lt.s32.totalorder %s18, 0
        %s185 = scalar_select %p184, %s18, 0
        %s186 = sadd.s32 %s185, %s183
        %s187 = smul.addr %s186, 8
        %s188 = scalar_lea.vmem %s0, %s187
      $region20: #{clip_encoder_layer.4} parent=15 // pred_fallthru
        _
      // Predicated region
      $region21: #{clip_encoder_layer.4} parent=15 // pred_check
        %p189 = pneg %p72
      $region22: #{clip_encoder_layer.4} parent=15 // pred_check_branch
        %191 = sbr.rel (%p189) target = $region24
      $region23: #{clip_encoder_layer.4} parent=15 // pred_region
        %p192 = scmp.lt.s32.totalorder %s17, 1
        %s193 = scalar_select %p192, %s17, 1
        %p194 = scmp.lt.s32.totalorder %s18, 0
        %s195 = scalar_select %p194, %s18, 0
        %s196 = sadd.s32 %s195, %s193
        %s197 = smul.addr %s196, 8
        %s198 = scalar_lea.vmem %s1, %s197
      $region24: #{clip_encoder_layer.4} parent=15 // pred_fallthru
        _
      // Predicated region
      $region25: #{clip_encoder_layer.4} parent=15 // pred_check
        %p199 = pneg %p100
      $region26: #{clip_encoder_layer.4} parent=15 // pred_check_branch
        %201 = sbr.rel (%p199) target = $region28
      $region27: #{clip_encoder_layer.4} parent=15 // pred_region
        %p202 = scmp.lt.s32.totalorder %s17, 1
        %s203 = scalar_select %p202, %s17, 1
        %p204 = scmp.lt.s32.totalorder %s18, 0
        %s205 = scalar_select %p204, %s18, 0
        %s206 = sadd.s32 %s205, %s203
        %s207 = smul.addr %s206, 8
        %s208 = scalar_lea.vmem %s2, %s207
      $region28: #{clip_encoder_layer.4} parent=15 // pred_fallthru
        _
      // Predicated region
      $region29: #{clip_encoder_layer.4} parent=15 // pred_check
        %p209 = pneg %p126
      $region30: #{clip_encoder_layer.4} parent=15 // pred_check_branch
        %211 = sbr.rel (%p209) target = $region32
      $region31: #{clip_encoder_layer.4} parent=15 // pred_region
        %p212 = scmp.lt.s32.totalorder %s17, 1
        %s213 = scalar_select %p212, %s17, 1
        %s214 = smul.addr %s213, 8
        %s215 = scalar_lea.vmem %s3, %s214
      $region32: #{clip_encoder_layer.4} parent=15 // pred_fallthru
        _
    $region16: #{clip_encoder_layer.4} parent=5 // pred_fallthru
      _
    %p216 = scmp.le.s32.totalorder 1, %s10
    %p217 = scmp.lt.s32.totalorder %s10, 3
    %p218 = pnand %p216, %p217
    %p219 = pneg %p218
    // Predicated region
    $region33: #{clip_encoder_layer.4} parent=5 // pred_check
      _
    $region34: #{clip_encoder_layer.4} parent=5 // pred_check_branch
      %221 = sbr.rel (%p218) target = $region36
    $region35: #{clip_encoder_layer.4} parent=5 // pred_region
      %s222 = ssub.s32 %s10, 1
      %p223 = scmp.lt.s32.totalorder %s19, 1
      %s224 = scalar_select %p223, %s19, 1
      %p225 = scmp.lt.s32.totalorder %s20, 0
      %s226 = scalar_select %p225, %s20, 0
      %s227 = sadd.s32 %s226, %s224
      %s228 = smul.addr %s227, 8
      %s229 = scalar_lea.vmem %s0, %s228
      %p230 = pneg %p50
      %p231 = pneg %p47
      %p232 = scmp.lt.s32.totalorder %s19, 1
      %s233 = scalar_select %p232, %s19, 1
      %p234 = scmp.lt.s32.totalorder %s20, 0
      %s235 = scalar_select %p234, %s20, 0
      %s236 = sadd.s32 %s235, %s233
      %s237 = smul.addr %s236, 8
      %s238 = scalar_lea.vmem %s1, %s237
      %p239 = pneg %p78
      %p240 = pneg %p75
      %p241 = scmp.lt.s32.totalorder %s19, 1
      %s242 = scalar_select %p241, %s19, 1
      %p243 = scmp.lt.s32.totalorder %s20, 0
      %s244 = scalar_select %p243, %s20, 0
      %s245 = sadd.s32 %s244, %s242
      %s246 = smul.addr %s245, 8
      %s247 = scalar_lea.vmem %s2, %s246
      %p248 = pneg %p106
      %p249 = pneg %p103
      %p250 = scmp.lt.s32.totalorder %s19, 1
      %s251 = scalar_select %p250, %s19, 1
      %s252 = smul.addr %s251, 8
      %s253 = scalar_lea.vmem %s3, %s252
      %p254 = pneg %p132
      %p255 = pneg %p129
      %p256 = pneg %p160
      %p257 = pneg %p157
      %p258 = scmp.lt.s32.totalorder %s19, 1
      %s259 = scalar_select %p258, %s19, 1
      %p260 = scmp.lt.s32.totalorder %s20, 0
      %s261 = scalar_select %p260, %s20, 0
      %s262 = sadd.s32 %s261, %s259
      %s263 = smul.addr %s262, 8
      %s264 = scalar_lea.vmem %s4, %s263
      %p265 = scmp.lt.s32.totalorder %s19, 1
      %s266 = scalar_select %p265, %s19, 1
      %p267 = scmp.lt.s32.totalorder %s20, 0
      %s268 = scalar_select %p267, %s20, 0
      %s269 = sadd.s32 %s268, %s266
      %s270 = smul.addr %s269, 8
      %s271 = scalar_lea.vmem %s0, %s270
      %p272 = scmp.lt.s32.totalorder %s19, 1
      %s273 = scalar_select %p272, %s19, 1
      %p274 = scmp.lt.s32.totalorder %s20, 0
      %s275 = scalar_select %p274, %s20, 0
      %s276 = sadd.s32 %s275, %s273
      %s277 = smul.addr %s276, 8
      %s278 = scalar_lea.vmem %s1, %s277
      %p279 = scmp.lt.s32.totalorder %s19, 1
      %s280 = scalar_select %p279, %s19, 1
      %p281 = scmp.lt.s32.totalorder %s20, 0
      %s282 = scalar_select %p281, %s20, 0
      %s283 = sadd.s32 %s282, %s280
      %s284 = smul.addr %s283, 8
      %s285 = scalar_lea.vmem %s2, %s284
      %p286 = scmp.lt.s32.totalorder %s19, 1
      %s287 = scalar_select %p286, %s19, 1
      %s288 = smul.addr %s287, 8
      %s289 = scalar_lea.vmem %s3, %s288
      %p290 = scmp.lt.s32.totalorder %s19, 1
      %s291 = scalar_select %p290, %s19, 1
      %p292 = scmp.lt.s32.totalorder %s20, 0
      %s293 = scalar_select %p292, %s20, 0
      %s294 = sadd.s32 %s293, %s291
      %s295 = smul.addr %s294, 8
      %s296 = scalar_lea.vmem %s4, %s295
      %v297 = vld [vmem:[%s289] sm:$0xff]
      %v298 = vld [vmem:[%s271] sm:$0xff]
      %v299 = vld [vmem:[%s278] sm:$0xff]
      %v300 = vld [vmem:[%s285] sm:$0xff]
      %vm301 = vcmask 64512
      %v303 = vsel %vm301, %v298, 0
      %v306 = vsel %vm301, %v299, 0
      %308 = vmatprep.subr.mxu0 0.0
      %309 = vmatpush1.xpose.msra.mxu0 %v306
      %310 = vmatprep.subr.mxu0 0.0
      %311 = vmatpush1.xpose.msra.mxu0 0.0
      %312 = vmatprep.subr.mxu0 0.0
      %313 = vmatpush1.xpose.msra.mxu0 0.0
      %314 = vmatprep.subr.mxu0 0.0
      %315 = vmatpush1.xpose.msra.mxu0 0.0
      %316 = vmatprep.subr.mxu0 0.0
      %317 = vmatpush1.xpose.msra.mxu0 0.0
      %318 = vmatprep.subr.mxu0 0.0
      %319 = vmatpush1.xpose.msra.mxu0 0.0
      %320 = vmatprep.subr.mxu0 0.0
      %321 = vmatpush1.xpose.msra.mxu0 0.0
      %322 = vmatprep.subr.mxu0 0.0
      %323 = vmatpush1.xpose.msra.mxu0 0.0
      %324 = vmatprep.subr.mxu0 0.0
      %325 = vmatpush1.xpose.msra.mxu0 0.0
      %326 = vmatprep.subr.mxu0 0.0
      %327 = vmatpush1.xpose.msra.mxu0 0.0
      %328 = vmatprep.subr.mxu0 0.0
      %329 = vmatpush1.xpose.msra.mxu0 0.0
      %330 = vmatprep.subr.mxu0 0.0
      %331 = vmatpush1.xpose.msra.mxu0 0.0
      %332 = vmatprep.subr.mxu0 0.0
      %333 = vmatpush1.xpose.msra.mxu0 0.0
      %334 = vmatprep.subr.mxu0 0.0
      %335 = vmatpush1.xpose.msra.mxu0 0.0
      %336 = vmatprep.subr.mxu0 0.0
      %337 = vmatpush1.xpose.msra.mxu0 0.0
      %338 = vmatprep.subr.mxu0 0.0
      %339 = vmatpush1.xpose.msra.mxu0 0.0
      %340 = vmatprep.subr.mxu0 0.0
      %341 = vmatpush1.xpose.msra.mxu0 0.0
      %342 = vmatprep.subr.mxu0 0.0
      %343 = vmatpush1.xpose.msra.mxu0 0.0
      %344 = vmatprep.subr.mxu0 0.0
      %345 = vmatpush1.xpose.msra.mxu0 0.0
      %346 = vmatprep.subr.mxu0 0.0
      %347 = vmatpush1.xpose.msra.mxu0 0.0
      %348 = vmatprep.subr.mxu0 0.0
      %349 = vmatpush1.xpose.msra.mxu0 0.0
      %350 = vmatprep.subr.mxu0 0.0
      %351 = vmatpush1.xpose.msra.mxu0 0.0
      %352 = vmatprep.subr.mxu0 0.0
      %353 = vmatpush1.xpose.msra.mxu0 0.0
      %354 = vmatprep.subr.mxu0 0.0
      %355 = vmatpush1.xpose.msra.mxu0 0.0
      %356 = vmatprep.subr.mxu0 0.0
      %357 = vmatpush1.xpose.msra.mxu0 0.0
      %358 = vmatprep.subr.mxu0 0.0
      %359 = vmatpush1.xpose.msra.mxu0 0.0
      %360 = vmatprep.subr.mxu0 0.0
      %361 = vmatpush1.xpose.msra.mxu0 0.0
      %362 = vmatprep.subr.mxu0 0.0
      %363 = vmatpush1.xpose.msra.mxu0 0.0
      %364 = vmatprep.subr.mxu0 0.0
      %365 = vmatpush1.xpose.msra.mxu0 0.0
      %366 = vmatprep.subr.mxu0 0.0
      %367 = vmatpush1.xpose.msra.mxu0 0.0
      %368 = vmatprep.subr.mxu0 0.0
      %369 = vmatpush1.xpose.msra.mxu0 0.0
      %370 = vmatprep.subr.mxu0 0.0
      %371 = vmatpush1.xpose.msra.mxu0 0.0
      %372 = vmatprep.mubr.f32.mxu0 0.0
      %373 = vmatmul.mubr.f32.gmra.mrb[0].mxu0 %v303
      %v374 = vpop.f32.mrb[0].mxu0
      %v375 = vadd.f32 %v297, %v374
      %v376 = vpop.f32.mrb[0].mxu0
      %377 = vdwg.mxu0
      %v378 = vsel %vm301, %v375, -inf
      %379 = vmax.xlane.f32.xlu0 %v378
      %v380 = vpop.xlane.xlu0 %379
      %v381 = vsub.f32 %v375, %v380
      %v382 = vmul.f32 %v381, 1.442695
      %v383 = vpow.pop %v382
      %v384 = vsel %vm301, %v383, 0.0
      %385 = vadd.xlane.f32.xlu0 %v384
      %v386 = vpop.xlane.xlu0 %385
      %v388 = vsel %vm301, %v383, 0
      %390 = vmatprep.subr.mxu0 0.0
      %391 = vmatpush1.msra.mxu0 %v300
      %392 = vmatprep.subr.mxu0 0.0
      %393 = vmatpush1.msra.mxu0 0.0
      %394 = vmatprep.subr.mxu0 0.0
      %395 = vmatpush1.msra.mxu0 0.0
      %396 = vmatprep.subr.mxu0 0.0
      %397 = vmatpush1.msra.mxu0 0.0
      %398 = vmatprep.subr.mxu0 0.0
      %399 = vmatpush1.msra.mxu0 0.0
      %400 = vmatprep.subr.mxu0 0.0
      %401 = vmatpush1.msra.mxu0 0.0
      %402 = vmatprep.subr.mxu0 0.0
      %403 = vmatpush1.msra.mxu0 0.0
      %404 = vmatprep.subr.mxu0 0.0
      %405 = vmatpush1.msra.mxu0 0.0
      %406 = vmatprep.subr.mxu0 0.0
      %407 = vmatpush1.msra.mxu0 0.0
      %408 = vmatprep.subr.mxu0 0.0
      %409 = vmatpush1.msra.mxu0 0.0
      %410 = vmatprep.subr.mxu0 0.0
      %411 = vmatpush1.msra.mxu0 0.0
      %412 = vmatprep.subr.mxu0 0.0
      %413 = vmatpush1.msra.mxu0 0.0
      %414 = vmatprep.subr.mxu0 0.0
      %415 = vmatpush1.msra.mxu0 0.0
      %416 = vmatprep.subr.mxu0 0.0
      %417 = vmatpush1.msra.mxu0 0.0
      %418 = vmatprep.subr.mxu0 0.0
      %419 = vmatpush1.msra.mxu0 0.0
      %420 = vmatprep.subr.mxu0 0.0
      %421 = vmatpush1.msra.mxu0 0.0
      %422 = vmatprep.subr.mxu0 0.0
      %423 = vmatpush1.msra.mxu0 0.0
      %424 = vmatprep.subr.mxu0 0.0
      %425 = vmatpush1.msra.mxu0 0.0
      %426 = vmatprep.subr.mxu0 0.0
      %427 = vmatpush1.msra.mxu0 0.0
      %428 = vmatprep.subr.mxu0 0.0
      %429 = vmatpush1.msra.mxu0 0.0
      %430 = vmatprep.subr.mxu0 0.0
      %431 = vmatpush1.msra.mxu0 0.0
      %432 = vmatprep.subr.mxu0 0.0
      %433 = vmatpush1.msra.mxu0 0.0
      %434 = vmatprep.subr.mxu0 0.0
      %435 = vmatpush1.msra.mxu0 0.0
      %436 = vmatprep.subr.mxu0 0.0
      %437 = vmatpush1.msra.mxu0 0.0
      %438 = vmatprep.subr.mxu0 0.0
      %439 = vmatpush1.msra.mxu0 0.0
      %440 = vmatprep.subr.mxu0 0.0
      %441 = vmatpush1.msra.mxu0 0.0
      %442 = vmatprep.subr.mxu0 0.0
      %443 = vmatpush1.msra.mxu0 0.0
      %444 = vmatprep.subr.mxu0 0.0
      %445 = vmatpush1.msra.mxu0 0.0
      %446 = vmatprep.subr.mxu0 0.0
      %447 = vmatpush1.msra.mxu0 0.0
      %448 = vmatprep.subr.mxu0 0.0
      %449 = vmatpush1.msra.mxu0 0.0
      %450 = vmatprep.subr.mxu0 0.0
      %451 = vmatpush1.msra.mxu0 0.0
      %452 = vmatprep.subr.mxu0 0.0
      %453 = vmatpush1.msra.mxu0 0.0
      %454 = vmatprep.mubr.f32.mxu0 0.0
      %455 = vmatmul.mubr.f32.gmra.mrb[0].mxu0 %v388
      %v456 = vpop.f32.mrb[0].mxu0
      %v457 = vadd.f32 0.0, %v456
      %v458 = vpop.f32.mrb[0].mxu0
      %459 = vdwg.mxu0
      %v460 = vrcp.pop %v386
      %v461 = vmul.f32 %v457, %v460
      %462 = vrot.lane.b32.xlu0 %v298, 120
      %v463 = vpop.permute.xlu0 %462
      %464 = vrot.lane.b32.xlu0 %v299, 120
      %v465 = vpop.permute.xlu0 %464
      %v466 = vsel %vm301, %v463, 0
      %v468 = vsel %vm301, %v465, 0
      %470 = vmatprep.subr.mxu0 0.0
      %471 = vmatpush1.xpose.msra.mxu0 %v468
      %472 = vmatprep.subr.mxu0 0.0
      %473 = vmatpush1.xpose.msra.mxu0 0.0
      %474 = vmatprep.subr.mxu0 0.0
      %475 = vmatpush1.xpose.msra.mxu0 0.0
      %476 = vmatprep.subr.mxu0 0.0
      %477 = vmatpush1.xpose.msra.mxu0 0.0
      %478 = vmatprep.subr.mxu0 0.0
      %479 = vmatpush1.xpose.msra.mxu0 0.0
      %480 = vmatprep.subr.mxu0 0.0
      %481 = vmatpush1.xpose.msra.mxu0 0.0
      %482 = vmatprep.subr.mxu0 0.0
      %483 = vmatpush1.xpose.msra.mxu0 0.0
      %484 = vmatprep.subr.mxu0 0.0
      %485 = vmatpush1.xpose.msra.mxu0 0.0
      %486 = vmatprep.subr.mxu0 0.0
      %487 = vmatpush1.xpose.msra.mxu0 0.0
      %488 = vmatprep.subr.mxu0 0.0
      %489 = vmatpush1.xpose.msra.mxu0 0.0
      %490 = vmatprep.subr.mxu0 0.0
      %491 = vmatpush1.xpose.msra.mxu0 0.0
      %492 = vmatprep.subr.mxu0 0.0
      %493 = vmatpush1.xpose.msra.mxu0 0.0
      %494 = vmatprep.subr.mxu0 0.0
      %495 = vmatpush1.xpose.msra.mxu0 0.0
      %496 = vmatprep.subr.mxu0 0.0
      %497 = vmatpush1.xpose.msra.mxu0 0.0
      %498 = vmatprep.subr.mxu0 0.0
      %499 = vmatpush1.xpose.msra.mxu0 0.0
      %500 = vmatprep.subr.mxu0 0.0
      %501 = vmatpush1.xpose.msra.mxu0 0.0
      %502 = vmatprep.subr.mxu0 0.0
      %503 = vmatpush1.xpose.msra.mxu0 0.0
      %504 = vmatprep.subr.mxu0 0.0
      %505 = vmatpush1.xpose.msra.mxu0 0.0
      %506 = vmatprep.subr.mxu0 0.0
      %507 = vmatpush1.xpose.msra.mxu0 0.0
      %508 = vmatprep.subr.mxu0 0.0
      %509 = vmatpush1.xpose.msra.mxu0 0.0
      %510 = vmatprep.subr.mxu0 0.0
      %511 = vmatpush1.xpose.msra.mxu0 0.0
      %512 = vmatprep.subr.mxu0 0.0
      %513 = vmatpush1.xpose.msra.mxu0 0.0
      %514 = vmatprep.subr.mxu0 0.0
      %515 = vmatpush1.xpose.msra.mxu0 0.0
      %516 = vmatprep.subr.mxu0 0.0
      %517 = vmatpush1.xpose.msra.mxu0 0.0
      %518 = vmatprep.subr.mxu0 0.0
      %519 = vmatpush1.xpose.msra.mxu0 0.0
      %520 = vmatprep.subr.mxu0 0.0
      %521 = vmatpush1.xpose.msra.mxu0 0.0
      %522 = vmatprep.subr.mxu0 0.0
      %523 = vmatpush1.xpose.msra.mxu0 0.0
      %524 = vmatprep.subr.mxu0 0.0
      %525 = vmatpush1.xpose.msra.mxu0 0.0
      %526 = vmatprep.subr.mxu0 0.0
      %527 = vmatpush1.xpose.msra.mxu0 0.0
      %528 = vmatprep.subr.mxu0 0.0
      %529 = vmatpush1.xpose.msra.mxu0 0.0
      %530 = vmatprep.subr.mxu0 0.0
      %531 = vmatpush1.xpose.msra.mxu0 0.0
      %532 = vmatprep.subr.mxu0 0.0
      %533 = vmatpush1.xpose.msra.mxu0 0.0
      %534 = vmatprep.mubr.f32.mxu0 0.0
      %535 = vmatmul.mubr.f32.gmra.mrb[0].mxu0 %v466
      %v536 = vpop.f32.mrb[0].mxu0
      %v537 = vadd.f32 %v297, %v536
      %v538 = vpop.f32.mrb[0].mxu0
      %539 = vdwg.mxu0
      %v540 = vsel %vm301, %v537, -inf
      %541 = vmax.xlane.f32.xlu0 %v540
      %v542 = vpop.xlane.xlu0 %541
      %v543 = vsub.f32 %v537, %v542
      %v544 = vmul.f32 %v543, 1.442695
      %v545 = vpow.pop %v544
      %v546 = vsel %vm301, %v545, 0.0
      %547 = vadd.xlane.f32.xlu0 %v546
      %v548 = vpop.xlane.xlu0 %547
      %550 = vrot.lane.b32.xlu0 %v300, 120
      %v551 = vpop.permute.xlu0 %550
      %v554 = vsel %vm301, %v545, 0
      %556 = vmatprep.subr.mxu0 0.0
      %557 = vmatpush1.msra.mxu0 %v551
      %558 = vmatprep.subr.mxu0 0.0
      %559 = vmatpush1.msra.mxu0 0.0
      %560 = vmatprep.subr.mxu0 0.0
      %561 = vmatpush1.msra.mxu0 0.0
      %562 = vmatprep.subr.mxu0 0.0
      %563 = vmatpush1.msra.mxu0 0.0
      %564 = vmatprep.subr.mxu0 0.0
      %565 = vmatpush1.msra.mxu0 0.0
      %566 = vmatprep.subr.mxu0 0.0
      %567 = vmatpush1.msra.mxu0 0.0
      %568 = vmatprep.subr.mxu0 0.0
      %569 = vmatpush1.msra.mxu0 0.0
      %570 = vmatprep.subr.mxu0 0.0
      %571 = vmatpush1.msra.mxu0 0.0
      %572 = vmatprep.subr.mxu0 0.0
      %573 = vmatpush1.msra.mxu0 0.0
      %574 = vmatprep.subr.mxu0 0.0
      %575 = vmatpush1.msra.mxu0 0.0
      %576 = vmatprep.subr.mxu0 0.0
      %577 = vmatpush1.msra.mxu0 0.0
      %578 = vmatprep.subr.mxu0 0.0
      %579 = vmatpush1.msra.mxu0 0.0
      %580 = vmatprep.subr.mxu0 0.0
      %581 = vmatpush1.msra.mxu0 0.0
      %582 = vmatprep.subr.mxu0 0.0
      %583 = vmatpush1.msra.mxu0 0.0
      %584 = vmatprep.subr.mxu0 0.0
      %585 = vmatpush1.msra.mxu0 0.0
      %586 = vmatprep.subr.mxu0 0.0
      %587 = vmatpush1.msra.mxu0 0.0
      %588 = vmatprep.subr.mxu0 0.0
      %589 = vmatpush1.msra.mxu0 0.0
      %590 = vmatprep.subr.mxu0 0.0
      %591 = vmatpush1.msra.mxu0 0.0
      %592 = vmatprep.subr.mxu0 0.0
      %593 = vmatpush1.msra.mxu0 0.0
      %594 = vmatprep.subr.mxu0 0.0
      %595 = vmatpush1.msra.mxu0 0.0
      %596 = vmatprep.subr.mxu0 0.0
      %597 = vmatpush1.msra.mxu0 0.0
      %598 = vmatprep.subr.mxu0 0.0
      %599 = vmatpush1.msra.mxu0 0.0
      %600 = vmatprep.subr.mxu0 0.0
      %601 = vmatpush1.msra.mxu0 0.0
      %602 = vmatprep.subr.mxu0 0.0
      %603 = vmatpush1.msra.mxu0 0.0
      %604 = vmatprep.subr.mxu0 0.0
      %605 = vmatpush1.msra.mxu0 0.0
      %606 = vmatprep.subr.mxu0 0.0
      %607 = vmatpush1.msra.mxu0 0.0
      %608 = vmatprep.subr.mxu0 0.0
      %609 = vmatpush1.msra.mxu0 0.0
      %610 = vmatprep.subr.mxu0 0.0
      %611 = vmatpush1.msra.mxu0 0.0
      %612 = vmatprep.subr.mxu0 0.0
      %613 = vmatpush1.msra.mxu0 0.0
      %614 = vmatprep.subr.mxu0 0.0
      %615 = vmatpush1.msra.mxu0 0.0
      %616 = vmatprep.subr.mxu0 0.0
      %617 = vmatpush1.msra.mxu0 0.0
      %618 = vmatprep.subr.mxu0 0.0
      %619 = vmatpush1.msra.mxu0 0.0
      %620 = vmatprep.mubr.f32.mxu0 0.0
      %621 = vmatmul.mubr.f32.gmra.mrb[0].mxu0 %v554
      %v622 = vpop.f32.mrb[0].mxu0
      %v623 = vadd.f32 0.0, %v622
      %v624 = vpop.f32.mrb[0].mxu0
      %625 = vdwg.mxu0
      %v626 = vrcp.pop %v548
      %v627 = vmul.f32 %v623, %v626
      %628 = vrot.lane.b32.xlu0 %v298, 112
      %v629 = vpop.permute.xlu0 %628
      %630 = vrot.lane.b32.xlu0 %v299, 112
      %v631 = vpop.permute.xlu0 %630
      %v632 = vsel %vm301, %v629, 0
      %v634 = vsel %vm301, %v631, 0
      %636 = vmatprep.subr.mxu0 0.0
      %637 = vmatpush1.xpose.msra.mxu0 %v634
      %638 = vmatprep.subr.mxu0 0.0
      %639 = vmatpush1.xpose.msra.mxu0 0.0
      %640 = vmatprep.subr.mxu0 0.0
      %641 = vmatpush1.xpose.msra.mxu0 0.0
      %642 = vmatprep.subr.mxu0 0.0
      %643 = vmatpush1.xpose.msra.mxu0 0.0
      %644 = vmatprep.subr.mxu0 0.0
      %645 = vmatpush1.xpose.msra.mxu0 0.0
      %646 = vmatprep.subr.mxu0 0.0
      %647 = vmatpush1.xpose.msra.mxu0 0.0
      %648 = vmatprep.subr.mxu0 0.0
      %649 = vmatpush1.xpose.msra.mxu0 0.0
      %650 = vmatprep.subr.mxu0 0.0
      %651 = vmatpush1.xpose.msra.mxu0 0.0
      %652 = vmatprep.subr.mxu0 0.0
      %653 = vmatpush1.xpose.msra.mxu0 0.0
      %654 = vmatprep.subr.mxu0 0.0
      %655 = vmatpush1.xpose.msra.mxu0 0.0
      %656 = vmatprep.subr.mxu0 0.0
      %657 = vmatpush1.xpose.msra.mxu0 0.0
      %658 = vmatprep.subr.mxu0 0.0
      %659 = vmatpush1.xpose.msra.mxu0 0.0
      %660 = vmatprep.subr.mxu0 0.0
      %661 = vmatpush1.xpose.msra.mxu0 0.0
      %662 = vmatprep.subr.mxu0 0.0
      %663 = vmatpush1.xpose.msra.mxu0 0.0
      %664 = vmatprep.subr.mxu0 0.0
      %665 = vmatpush1.xpose.msra.mxu0 0.0
      %666 = vmatprep.subr.mxu0 0.0
      %667 = vmatpush1.xpose.msra.mxu0 0.0
      %668 = vmatprep.subr.mxu0 0.0
      %669 = vmatpush1.xpose.msra.mxu0 0.0
      %670 = vmatprep.subr.mxu0 0.0
      %671 = vmatpush1.xpose.msra.mxu0 0.0
      %672 = vmatprep.subr.mxu0 0.0
      %673 = vmatpush1.xpose.msra.mxu0 0.0
      %674 = vmatprep.subr.mxu0 0.0
      %675 = vmatpush1.xpose.msra.mxu0 0.0
      %676 = vmatprep.subr.mxu0 0.0
      %677 = vmatpush1.xpose.msra.mxu0 0.0
      %678 = vmatprep.subr.mxu0 0.0
      %679 = vmatpush1.xpose.msra.mxu0 0.0
      %680 = vmatprep.subr.mxu0 0.0
      %681 = vmatpush1.xpose.msra.mxu0 0.0
      %682 = vmatprep.subr.mxu0 0.0
      %683 = vmatpush1.xpose.msra.mxu0 0.0
      %684 = vmatprep.subr.mxu0 0.0
      %685 = vmatpush1.xpose.msra.mxu0 0.0
      %686 = vmatprep.subr.mxu0 0.0
      %687 = vmatpush1.xpose.msra.mxu0 0.0
      %688 = vmatprep.subr.mxu0 0.0
      %689 = vmatpush1.xpose.msra.mxu0 0.0
      %690 = vmatprep.subr.mxu0 0.0
      %691 = vmatpush1.xpose.msra.mxu0 0.0
      %692 = vmatprep.subr.mxu0 0.0
      %693 = vmatpush1.xpose.msra.mxu0 0.0
      %694 = vmatprep.subr.mxu0 0.0
      %695 = vmatpush1.xpose.msra.mxu0 0.0
      %696 = vmatprep.subr.mxu0 0.0
      %697 = vmatpush1.xpose.msra.mxu0 0.0
      %698 = vmatprep.subr.mxu0 0.0
      %699 = vmatpush1.xpose.msra.mxu0 0.0
      %700 = vmatprep.mubr.f32.mxu0 0.0
      %701 = vmatmul.mubr.f32.gmra.mrb[0].mxu0 %v632
      %v702 = vpop.f32.mrb[0].mxu0
      %v703 = vadd.f32 %v297, %v702
      %v704 = vpop.f32.mrb[0].mxu0
      %705 = vdwg.mxu0
      %v706 = vsel %vm301, %v703, -inf
      %707 = vmax.xlane.f32.xlu0 %v706
      %v708 = vpop.xlane.xlu0 %707
      %v709 = vsub.f32 %v703, %v708
      %v710 = vmul.f32 %v709, 1.442695
      %v711 = vpow.pop %v710
      %v712 = vsel %vm301, %v711, 0.0
      %713 = vadd.xlane.f32.xlu0 %v712
      %v714 = vpop.xlane.xlu0 %713
      %715 = vrot.lane.b32.xlu0 %v300, 112
      %v716 = vpop.permute.xlu0 %715
      %v719 = vsel %vm301, %v711, 0
      %721 = vmatprep.subr.mxu0 0.0
      %722 = vmatpush1.msra.mxu0 %v716
      %723 = vmatprep.subr.mxu0 0.0
      %724 = vmatpush1.msra.mxu0 0.0
      %725 = vmatprep.subr.mxu0 0.0
      %726 = vmatpush1.msra.mxu0 0.0
      %727 = vmatprep.subr.mxu0 0.0
      %728 = vmatpush1.msra.mxu0 0.0
      %729 = vmatprep.subr.mxu0 0.0
      %730 = vmatpush1.msra.mxu0 0.0
      %731 = vmatprep.subr.mxu0 0.0
      %732 = vmatpush1.msra.mxu0 0.0
      %733 = vmatprep.subr.mxu0 0.0
      %734 = vmatpush1.msra.mxu0 0.0
      %735 = vmatprep.subr.mxu0 0.0
      %736 = vmatpush1.msra.mxu0 0.0
      %737 = vmatprep.subr.mxu0 0.0
      %738 = vmatpush1.msra.mxu0 0.0
      %739 = vmatprep.subr.mxu0 0.0
      %740 = vmatpush1.msra.mxu0 0.0
      %741 = vmatprep.subr.mxu0 0.0
      %742 = vmatpush1.msra.mxu0 0.0
      %743 = vmatprep.subr.mxu0 0.0
      %744 = vmatpush1.msra.mxu0 0.0
      %745 = vmatprep.subr.mxu0 0.0
      %746 = vmatpush1.msra.mxu0 0.0
      %747 = vmatprep.subr.mxu0 0.0
      %748 = vmatpush1.msra.mxu0 0.0
      %749 = vmatprep.subr.mxu0 0.0
      %750 = vmatpush1.msra.mxu0 0.0
      %751 = vmatprep.subr.mxu0 0.0
      %752 = vmatpush1.msra.mxu0 0.0
      %753 = vmatprep.subr.mxu0 0.0
      %754 = vmatpush1.msra.mxu0 0.0
      %755 = vmatprep.subr.mxu0 0.0
      %756 = vmatpush1.msra.mxu0 0.0
      %757 = vmatprep.subr.mxu0 0.0
      %758 = vmatpush1.msra.mxu0 0.0
      %759 = vmatprep.subr.mxu0 0.0
      %760 = vmatpush1.msra.mxu0 0.0
      %761 = vmatprep.subr.mxu0 0.0
      %762 = vmatpush1.msra.mxu0 0.0
      %763 = vmatprep.subr.mxu0 0.0
      %764 = vmatpush1.msra.mxu0 0.0
      %765 = vmatprep.subr.mxu0 0.0
      %766 = vmatpush1.msra.mxu0 0.0
      %767 = vmatprep.subr.mxu0 0.0
      %768 = vmatpush1.msra.mxu0 0.0
      %769 = vmatprep.subr.mxu0 0.0
      %770 = vmatpush1.msra.mxu0 0.0
      %771 = vmatprep.subr.mxu0 0.0
      %772 = vmatpush1.msra.mxu0 0.0
      %773 = vmatprep.subr.mxu0 0.0
      %774 = vmatpush1.msra.mxu0 0.0
      %775 = vmatprep.subr.mxu0 0.0
      %776 = vmatpush1.msra.mxu0 0.0
      %777 = vmatprep.subr.mxu0 0.0
      %778 = vmatpush1.msra.mxu0 0.0
      %779 = vmatprep.subr.mxu0 0.0
      %780 = vmatpush1.msra.mxu0 0.0
      %781 = vmatprep.subr.mxu0 0.0
      %782 = vmatpush1.msra.mxu0 0.0
      %783 = vmatprep.subr.mxu0 0.0
      %784 = vmatpush1.msra.mxu0 0.0
      %785 = vmatprep.mubr.f32.mxu0 0.0
      %786 = vmatmul.mubr.f32.gmra.mrb[0].mxu0 %v719
      %v787 = vpop.f32.mrb[0].mxu0
      %v788 = vadd.f32 0.0, %v787
      %v789 = vpop.f32.mrb[0].mxu0
      %790 = vdwg.mxu0
      %v791 = vrcp.pop %v714
      %v792 = vmul.f32 %v788, %v791
      %793 = vrot.lane.b32.xlu0 %v298, 104
      %v794 = vpop.permute.xlu0 %793
      %795 = vrot.lane.b32.xlu0 %v299, 104
      %v796 = vpop.permute.xlu0 %795
      %v797 = vsel %vm301, %v794, 0
      %v799 = vsel %vm301, %v796, 0
      %801 = vmatprep.subr.mxu0 0.0
      %802 = vmatpush1.xpose.msra.mxu0 %v799
      %803 = vmatprep.subr.mxu0 0.0
      %804 = vmatpush1.xpose.msra.mxu0 0.0
      %805 = vmatprep.subr.mxu0 0.0
      %806 = vmatpush1.xpose.msra.mxu0 0.0
      %807 = vmatprep.subr.mxu0 0.0
      %808 = vmatpush1.xpose.msra.mxu0 0.0
      %809 = vmatprep.subr.mxu0 0.0
      %810 = vmatpush1.xpose.msra.mxu0 0.0
      %811 = vmatprep.subr.mxu0 0.0
      %812 = vmatpush1.xpose.msra.mxu0 0.0
      %813 = vmatprep.subr.mxu0 0.0
      %814 = vmatpush1.xpose.msra.mxu0 0.0
      %815 = vmatprep.subr.mxu0 0.0
      %816 = vmatpush1.xpose.msra.mxu0 0.0
      %817 = vmatprep.subr.mxu0 0.0
      %818 = vmatpush1.xpose.msra.mxu0 0.0
      %819 = vmatprep.subr.mxu0 0.0
      %820 = vmatpush1.xpose.msra.mxu0 0.0
      %821 = vmatprep.subr.mxu0 0.0
      %822 = vmatpush1.xpose.msra.mxu0 0.0
      %823 = vmatprep.subr.mxu0 0.0
      %824 = vmatpush1.xpose.msra.mxu0 0.0
      %825 = vmatprep.subr.mxu0 0.0
      %826 = vmatpush1.xpose.msra.mxu0 0.0
      %827 = vmatprep.subr.mxu0 0.0
      %828 = vmatpush1.xpose.msra.mxu0 0.0
      %829 = vmatprep.subr.mxu0 0.0
      %830 = vmatpush1.xpose.msra.mxu0 0.0
      %831 = vmatprep.subr.mxu0 0.0
      %832 = vmatpush1.xpose.msra.mxu0 0.0
      %833 = vmatprep.subr.mxu0 0.0
      %834 = vmatpush1.xpose.msra.mxu0 0.0
      %835 = vmatprep.subr.mxu0 0.0
      %836 = vmatpush1.xpose.msra.mxu0 0.0
      %837 = vmatprep.subr.mxu0 0.0
      %838 = vmatpush1.xpose.msra.mxu0 0.0
      %839 = vmatprep.subr.mxu0 0.0
      %840 = vmatpush1.xpose.msra.mxu0 0.0
      %841 = vmatprep.subr.mxu0 0.0
      %842 = vmatpush1.xpose.msra.mxu0 0.0
      %843 = vmatprep.subr.mxu0 0.0
      %844 = vmatpush1.xpose.msra.mxu0 0.0
      %845 = vmatprep.subr.mxu0 0.0
      %846 = vmatpush1.xpose.msra.mxu0 0.0
      %847 = vmatprep.subr.mxu0 0.0
      %848 = vmatpush1.xpose.msra.mxu0 0.0
      %849 = vmatprep.subr.mxu0 0.0
      %850 = vmatpush1.xpose.msra.mxu0 0.0
      %851 = vmatprep.subr.mxu0 0.0
      %852 = vmatpush1.xpose.msra.mxu0 0.0
      %853 = vmatprep.subr.mxu0 0.0
      %854 = vmatpush1.xpose.msra.mxu0 0.0
      %855 = vmatprep.subr.mxu0 0.0
      %856 = vmatpush1.xpose.msra.mxu0 0.0
      %857 = vmatprep.subr.mxu0 0.0
      %858 = vmatpush1.xpose.msra.mxu0 0.0
      %859 = vmatprep.subr.mxu0 0.0
      %860 = vmatpush1.xpose.msra.mxu0 0.0
      %861 = vmatprep.subr.mxu0 0.0
      %862 = vmatpush1.xpose.msra.mxu0 0.0
      %863 = vmatprep.subr.mxu0 0.0
      %864 = vmatpush1.xpose.msra.mxu0 0.0
      %865 = vmatprep.mubr.f32.mxu0 0.0
      %866 = vmatmul.mubr.f32.gmra.mrb[0].mxu0 %v797
      %v867 = vpop.f32.mrb[0].mxu0
      %v868 = vadd.f32 %v297, %v867
      %v869 = vpop.f32.mrb[0].mxu0
      %870 = vdwg.mxu0
      %v871 = vsel %vm301, %v868, -inf
      %872 = vmax.xlane.f32.xlu0 %v871
      %v873 = vpop.xlane.xlu0 %872
      %v874 = vsub.f32 %v868, %v873
      %v875 = vmul.f32 %v874, 1.442695
      %v876 = vpow.pop %v875
      %v877 = vsel %vm301, %v876, 0.0
      %878 = vadd.xlane.f32.xlu0 %v877
      %v879 = vpop.xlane.xlu0 %878
      %880 = vrot.lane.b32.xlu0 %v300, 104
      %v881 = vpop.permute.xlu0 %880
      %v884 = vsel %vm301, %v876, 0
      %886 = vmatprep.subr.mxu0 0.0
      %887 = vmatpush1.msra.mxu0 %v881
      %888 = vmatprep.subr.mxu0 0.0
      %889 = vmatpush1.msra.mxu0 0.0
      %890 = vmatprep.subr.mxu0 0.0
      %891 = vmatpush1.msra.mxu0 0.0
      %892 = vmatprep.subr.mxu0 0.0
      %893 = vmatpush1.msra.mxu0 0.0
      %894 = vmatprep.subr.mxu0 0.0
      %895 = vmatpush1.msra.mxu0 0.0
      %896 = vmatprep.subr.mxu0 0.0
      %897 = vmatpush1.msra.mxu0 0.0
      %898 = vmatprep.subr.mxu0 0.0
      %899 = vmatpush1.msra.mxu0 0.0
      %900 = vmatprep.subr.mxu0 0.0
      %901 = vmatpush1.msra.mxu0 0.0
      %902 = vmatprep.subr.mxu0 0.0
      %903 = vmatpush1.msra.mxu0 0.0
      %904 = vmatprep.subr.mxu0 0.0
      %905 = vmatpush1.msra.mxu0 0.0
      %906 = vmatprep.subr.mxu0 0.0
      %907 = vmatpush1.msra.mxu0 0.0
      %908 = vmatprep.subr.mxu0 0.0
      %909 = vmatpush1.msra.mxu0 0.0
      %910 = vmatprep.subr.mxu0 0.0
      %911 = vmatpush1.msra.mxu0 0.0
      %912 = vmatprep.subr.mxu0 0.0
      %913 = vmatpush1.msra.mxu0 0.0
      %914 = vmatprep.subr.mxu0 0.0
      %915 = vmatpush1.msra.mxu0 0.0
      %916 = vmatprep.subr.mxu0 0.0
      %917 = vmatpush1.msra.mxu0 0.0
      %918 = vmatprep.subr.mxu0 0.0
      %919 = vmatpush1.msra.mxu0 0.0
      %920 = vmatprep.subr.mxu0 0.0
      %921 = vmatpush1.msra.mxu0 0.0
      %922 = vmatprep.subr.mxu0 0.0
      %923 = vmatpush1.msra.mxu0 0.0
      %924 = vmatprep.subr.mxu0 0.0
      %925 = vmatpush1.msra.mxu0 0.0
      %926 = vmatprep.subr.mxu0 0.0
      %927 = vmatpush1.msra.mxu0 0.0
      %928 = vmatprep.subr.mxu0 0.0
      %929 = vmatpush1.msra.mxu0 0.0
      %930 = vmatprep.subr.mxu0 0.0
      %931 = vmatpush1.msra.mxu0 0.0
      %932 = vmatprep.subr.mxu0 0.0
      %933 = vmatpush1.msra.mxu0 0.0
      %934 = vmatprep.subr.mxu0 0.0
      %935 = vmatpush1.msra.mxu0 0.0
      %936 = vmatprep.subr.mxu0 0.0
      %937 = vmatpush1.msra.mxu0 0.0
      %938 = vmatprep.subr.mxu0 0.0
      %939 = vmatpush1.msra.mxu0 0.0
      %940 = vmatprep.subr.mxu0 0.0
      %941 = vmatpush1.msra.mxu0 0.0
      %942 = vmatprep.subr.mxu0 0.0
      %943 = vmatpush1.msra.mxu0 0.0
      %944 = vmatprep.subr.mxu0 0.0
      %945 = vmatpush1.msra.mxu0 0.0
      %946 = vmatprep.subr.mxu0 0.0
      %947 = vmatpush1.msra.mxu0 0.0
      %948 = vmatprep.subr.mxu0 0.0
      %949 = vmatpush1.msra.mxu0 0.0
      %950 = vmatprep.mubr.f32.mxu0 0.0
      %951 = vmatmul.mubr.f32.gmra.mrb[0].mxu0 %v884
      %v952 = vpop.f32.mrb[0].mxu0
      %v953 = vadd.f32 0.0, %v952
      %v954 = vpop.f32.mrb[0].mxu0
      %955 = vdwg.mxu0
      %v956 = vrcp.pop %v879
      %v957 = vmul.f32 %v953, %v956
      %959 = vrot.lane.b32.xlu0 %v627, 8
      %v960 = vpop.permute.xlu0 %959
      %963 = vrot.lane.b32.xlu0 %v792, 16
      %v964 = vpop.permute.xlu0 %963
      %967 = vrot.lane.b32.xlu0 %v957, 24
      %v968 = vpop.permute.xlu0 %967
      %v970 = vsel %vm301, %v461, %v960
      %vm971 = vcmask 130048
      %v972 = vsel %vm971, %v970, %v964
      %vm973 = vcmask 195584
      %v974 = vsel %vm973, %v972, %v968
      %vm975 = vcmask 261120
      %976 = vst.msk [vmem:[%s296] sm:$0xff] %vm975, %v974
      %p977 = scmp.lt.s32.totalorder %s19, 1
      %s978 = scalar_select %p977, %s19, 1
      %p979 = scmp.lt.s32.totalorder %s20, 0
      %s980 = scalar_select %p979, %s20, 0
      %s981 = sadd.s32 %s980, %s978
      %s982 = smul.addr %s981, 8
      %s983 = scalar_lea.vmem %s4, %s982
      // Predicated region
      $region37: #{clip_encoder_layer.4} parent=35 // pred_check
        %p984 = pneg %p157
      $region38: #{clip_encoder_layer.4} parent=35 // pred_check_branch
        %986 = sbr.rel (%p984) target = $region40
      $region39: #{clip_encoder_layer.4} parent=35 // pred_region
        _
      $region40: #{clip_encoder_layer.4} parent=35 // pred_fallthru
        _
    $region36: #{clip_encoder_layer.4} parent=5 // pred_fallthru
      _
    %p987 = scmp.le.s32.totalorder 2, %s10
    // Predicated region
    $region41: #{clip_encoder_layer.4} parent=5 // pred_check
      %p988 = pneg %p987
    $region42: #{clip_encoder_layer.4} parent=5 // pred_check_branch
      %990 = sbr.rel (%p988) target = $region44
    $region43: #{clip_encoder_layer.4} parent=5 // pred_region
      %s991 = ssub.s32 %s10, 2
      // Predicated region
      $region45: #{clip_encoder_layer.4} parent=43 // pred_check
        %p992 = pneg %p163
      $region46: #{clip_encoder_layer.4} parent=43 // pred_check_branch
        %994 = sbr.rel (%p992) target = $region48
      $region47: #{clip_encoder_layer.4} parent=43 // pred_region
        %p995 = scmp.lt.s32.totalorder %s21, 1
        %s996 = scalar_select %p995, %s21, 1
        %p997 = scmp.lt.s32.totalorder %s22, 0
        %s998 = scalar_select %p997, %s22, 0
        %s999 = sadd.s32 %s998, %s996
        %s1000 = smul.addr %s999, 8
        %s1001 = scalar_lea.vmem %s4, %s1000
      $region48: #{clip_encoder_layer.4} parent=43 // pred_fallthru
        _
    $region44: #{clip_encoder_layer.4} parent=5 // pred_fallthru
      _
  $region6: #{clip_encoder_layer.4} parent=0 // loop_footer
    %s14 = sadd.s32 1, %s10
  $region7: #{clip_encoder_layer.4} parent=0 // loop_footer_branch
    %9 = sbr.rel target = $region3
  $region8: #{clip_encoder_layer.4} parent=0 // loop_exit
    _

</llo_original>
